<compile_context>
chip_gen: v7x
topology: tpu7x:2x2x1
jax: 0.10.0
libtpu: 0.0.40
codegen_flags: <defaults>
</compile_context>

<pallas_src>
import functools
import math

import jax
import jax.numpy as jnp
from jax.experimental import pallas as pl
from jax.experimental.pallas import tpu as pltpu

LANE = 128                 # channel dims padded to multiples of the TPU lane width
POOLED_ROWS_TARGET = 1024  # aim for up to ~1024 pooled pixels per grid step


def _rup(x, m):
    return ((x + m - 1) // m) * m


@functools.lru_cache(maxsize=None)
def _device_kind():
    try:
        return jax.devices()[0].device_kind.lower()
    except Exception:
        return ""


@functools.lru_cache(maxsize=None)
def _vmem_limit_bytes():
    # v7x: 64 MiB physical VMEM per TensorCore; v5e/v6e: 128 MiB physical.
    # Scoped defaults (16/32 MiB) are raised explicitly per review feedback.
    return (40 << 20) if "v7" in _device_kind() else (64 << 20)


def _tile_budget_bytes():
    # Conservative per-step working-set target (leaves headroom under the limit
    # for compiler scratch and elementwise temporaries we may have under-counted).
    return _vmem_limit_bytes() // 3


@functools.lru_cache(maxsize=None)
def _default_compute_dtype_name():
    kind = _device_kind()
    # v5e has no bf16 VALU -> keep BN/pool VPU math in f32 there; bf16 elsewhere.
    if "v5 lite" in kind or "v5e" in kind or "v5lite" in kind:
        return "float32"
    return "bfloat16"


# ----------------------------------------------------------------------------
# Pallas kernel: fused  BN(eval) -> ReLU -> AvgPool2d(2) -> 1x1 Conv (MXU)
#
# Block layout (per grid step):
#   x_ref : (tile_r, 2, Wo, 2*Cp)   bf16   tile_r row-pairs of the NHWC image;
#                                          lane axis = [W-even pixel | W-odd pixel]
#   s_ref : (1, 2*Cp)               compute dtype, BN scale * 0.25, tiled twice
#   b_ref : (1, 2*Cp)               compute dtype, BN shift * 0.25, tiled twice
#   w_ref : (Cp, Np)                bf16   1x1 conv weight (VMEM-resident)
#   o_ref : (tile_r*Wo, Np)         f32
#
# BN+ReLU is applied to the whole block at once (0.25 pre-folded => summing the
# 4 window pixels gives the exact AvgPool2d(2) result).  The H-pair sum is an add
# over axis 1; the W-pair sum adds the two 128-aligned lane halves.  The pooled
# tile is then fed to the MXU with f32 accumulation.  Padded channels carry
# scale=shift=0 and zero weight rows, so they contribute exactly 0.
# ----------------------------------------------------------------------------
def _transition_kernel(x_ref, s_ref, b_ref, w_ref, o_ref, *, cp, rows):
    x = x_ref[...]                                   # (tile_r, 2, Wo, 2*Cp) bf16
    s = s_ref[...]                                   # (1, 2*Cp)
    b = b_ref[...]
    a = jnp.maximum(x.astype(s.dtype) * s + b, 0.0)  # BN(eval)+ReLU (0.25 folded)
    row = a[:, 0, :, :] + a[:, 1, :, :]              # H-pair sum  -> (tile_r, Wo, 2*Cp)
    pooled = row[:, :, :cp] + row[:, :, cp:]         # W-pair sum  -> (tile_r, Wo, Cp)
    lhs = pooled.reshape(rows, cp).astype(jnp.bfloat16)
    o_ref[...] = jnp.dot(lhs, w_ref[...], preferred_element_type=jnp.float32)


@functools.lru_cache(maxsize=None)
def _transition_call(rp, tile_r, wo, cp, np_):
    rows = tile_r * wo
    kernel = functools.partial(_transition_kernel, cp=cp, rows=rows)
    return pl.pallas_call(
        kernel,
        out_shape=jax.ShapeDtypeStruct((rp * wo, np_), jnp.float32),
        grid=(rp // tile_r,),
        in_specs=[
            pl.BlockSpec((tile_r, 2, wo, 2 * cp), lambda i: (i, 0, 0, 0)),  # activations
            pl.BlockSpec((1, 2 * cp), lambda i: (0, 0)),                    # BN scale*0.25
            pl.BlockSpec((1, 2 * cp), lambda i: (0, 0)),                    # BN shift*0.25
            pl.BlockSpec((cp, np_), lambda i: (0, 0)),                      # conv weight
        ],
        out_specs=pl.BlockSpec((rows, np_), lambda i: (i, 0)),
        compiler_params=pltpu.CompilerParams(
            dimension_semantics=("parallel",),
            vmem_limit_bytes=_vmem_limit_bytes(),
        ),
    )


# ----------------------------------------------------------------------------
# Generation/VMEM-aware tile selection (tile_r = number of image row-pairs per
# grid step; each unit of tile_r produces Wo pooled output pixels).
# ----------------------------------------------------------------------------
def _pick_tile_r(R, wo, cp, np_, compute_bytes):
    in_b = 2 * (2 * wo * 2 * cp * 2)            # double-buffered bf16 input rows
    out_b = 2 * (wo * np_ * 4)                  # double-buffered f32 output rows
    tmp_b = 7 * wo * cp * compute_bytes         # BN/pool temporaries (a, row, pooled, lhs)
    per_r = in_b + out_b + tmp_b
    fixed = 2 * (cp * np_ * 2) + 4 * (2 * cp * 4)   # weight buffers + scale/shift
    budget = max(_tile_budget_bytes() - fixed, per_r)
    cap = int(min(budget // per_r, max(POOLED_ROWS_TARGET // wo, 1), R))
    cap = max(cap, 1)
    if cap >= R:
        return R                                 # single grid step, block == full array
    # (tile_r * wo) must be a multiple of 8 so the lane-dense output block tiles cleanly.
    align = 8 // math.gcd(wo, 8)
    cap = max((cap // align) * align, align)
    t = cap
    while t >= align and t * 2 >= cap:           # prefer an exact divisor of R (no padding)
        if R % t == 0:
            return t
        t -= align
    return cap                                   # fall back: pad R up to a multiple of cap


# ----------------------------------------------------------------------------
# One-time parameter preparation (BN fold + AvgPool fold + padding + casts)
# ----------------------------------------------------------------------------
def prepare_transition_params(gamma, beta, mean, var, w, eps=1e-5, compute_dtype=None):
    """Fold BatchNorm2d(eval) + the AvgPool 1/4 factor into scale/shift; pad once.

    w is the 1x1 conv weight stored as (Cin, Cout)  (PyTorch stores it as
    (Cout, Cin, 1, 1); transpose/squeeze when importing real weights).
    """
    cin, cout = w.shape
    cp, np_ = _rup(cin, LANE), _rup(cout, LANE)
    if compute_dtype is None:
        compute_dtype = jnp.dtype(_default_compute_dtype_name())

    scale = gamma / jnp.sqrt(var + eps)           # eps matches BatchNorm2d default
    shift = beta - mean * scale
    # Fold AvgPool2d(2): relu(0.25*(s*x+b)) == 0.25*relu(s*x+b)  (exact, power of 2).
    scale = scale * 0.25
    shift = shift * 0.25

    s_pad = jnp.zeros((cp,), jnp.float32).at[:cin].set(scale)
    b_pad = jnp.zeros((cp,), jnp.float32).at[:cin].set(shift)
    # Pre-tile to (1, 2*Cp): the kernel's lane axis holds two W-adjacent pixels.
    s_p = jnp.tile(s_pad, 2).reshape(1, 2 * cp).astype(compute_dtype)
    b_p = jnp.tile(b_pad, 2).reshape(1, 2 * cp).astype(compute_dtype)
    w_p = jnp.zeros((cp, np_), jnp.bfloat16).at[:cin, :cout].set(w.astype(jnp.bfloat16))
    return {"scale": s_p, "shift": b_p, "w": w_p}


# ----------------------------------------------------------------------------
# Forward
# ----------------------------------------------------------------------------
def _forward_impl(x_nhwc, scale_p, shift_p, w_p, cout):
    B, H, W, C = x_nhwc.shape
    assert H % 2 == 0 and W % 2 == 0
    Ho, Wo = H // 2, W // 2
    cp = scale_p.shape[1] // 2
    np_ = w_p.shape[1]

    # Channel pad + bf16 cast (fuses with the NCHW->NHWC transpose of the caller
    # into a single XLA layout pass; zero extra passes when the caller already
    # hands us NHWC bf16 padded activations).
    x = x_nhwc
    if C != cp:
        x = jnp.pad(x, ((0, 0), (0, 0), (0, 0), (0, cp - C)))
    x = x.astype(jnp.bfloat16)

    # Copy-free reshape: (B, H, W, Cp) -> (B*Ho, 2, Wo, 2*Cp).
    # axis1 = H parity of the pool window, lane axis = [W-even pixel | W-odd pixel].
    R = B * Ho
    x4 = x.reshape(R, 2, Wo, 2 * cp)

    tile_r = _pick_tile_r(R, Wo, cp, np_, scale_p.dtype.itemsize)
    Rp = _rup(R, tile_r)
    if Rp != R:
        # Rare ragged tail; padded rows are computed but sliced off below.
        x4 = jnp.pad(x4, ((0, Rp - R), (0, 0), (0, 0), (0, 0)))

    out = _transition_call(Rp, tile_r, Wo, cp, np_)(x4, scale_p, shift_p, w_p)

    # Slice padding off only at the module boundary.
    return out[: R * Wo, :cout].reshape(B, Ho, Wo, cout)


@functools.partial(jax.jit, static_argnames=("cout",))
def transition_forward(x_nchw, scale_p, shift_p, w_p, *, cout):
    """BatchNorm2d(eval) -> ReLU -> Conv2d(1x1, bias=False) -> AvgPool2d(2).

    x_nchw: (B, Cin, H, W) float32.  Returns (B, Cout, H//2, W//2) float32.
    """
    x = jnp.transpose(x_nchw, (0, 2, 3, 1))                   # NCHW -> NHWC
    y = _forward_impl(x, scale_p, shift_p, w_p, cout)
    return jnp.transpose(y, (0, 3, 1, 2))                     # NHWC -> NCHW


@functools.partial(jax.jit, static_argnames=("cout",))
def transition_forward_nhwc(x_nhwc, scale_p, shift_p, w_p, *, cout):
    """Same op with an NHWC in/out interface (skips both layout transposes)."""
    return _forward_impl(x_nhwc, scale_p, shift_p, w_p, cout)


# ----------------------------------------------------------------------------
# Pure-JAX reference (f32) for a correctness sanity check
# ----------------------------------------------------------------------------
def transition_reference(x_nchw, gamma, beta, mean, var, w, eps=1e-5):
    scale = gamma / jnp.sqrt(var + eps)
    shift = beta - mean * scale
    h = jnp.maximum(x_nchw * scale[None, :, None, None] + shift[None, :, None, None], 0.0)
    y = jnp.einsum("bchw,co->bohw", h, w)                       # 1x1 conv, no bias
    B, Co, H, W = y.shape
    return y.reshape(B, Co, H // 2, 2, W // 2, 2).mean(axis=(3, 5))   # AvgPool2d(2)


if __name__ == "__main__":
    key = jax.random.PRNGKey(0)
    k_x, k_w, k_g, k_b, k_m, k_v = jax.random.split(key, 6)

    # Small DenseNet-style transition (reduction = 0.5).
    B, Cin, H, W = 2, 32, 32, 32
    Cout = 16

    x = jax.random.normal(k_x, (B, Cin, H, W), jnp.float32)
    w = jax.random.normal(k_w, (Cin, Cout), jnp.float32) / math.sqrt(Cin)
    gamma = 1.0 + 0.1 * jax.random.normal(k_g, (Cin,), jnp.float32)
    beta = 0.1 * jax.random.normal(k_b, (Cin,), jnp.float32)
    mean = 0.1 * jax.random.normal(k_m, (Cin,), jnp.float32)
    var = 1.0 + 0.1 * jax.random.uniform(k_v, (Cin,), jnp.float32)

    params = prepare_transition_params(gamma, beta, mean, var, w)

    y = transition_forward(x, params["scale"], params["shift"], params["w"], cout=Cout)
    y = jax.block_until_ready(y)

    assert y.shape == (B, Cout, H // 2, W // 2)
    assert bool(jnp.all(jnp.isfinite(y)))

    y_ref = transition_reference(x, gamma, beta, mean, var, w)
    max_err = float(jnp.max(jnp.abs(y - y_ref)))
    assert max_err < 5e-2, f"max_err={max_err}"   # bf16 activation/matmul tolerance

    print("KERNEL_OK")
</pallas_src>

<mosaic_0001>
module attributes {stable_mosaic.version = 11 : i64} {
  func.func @_transition_kernel(%arg0: i32, %arg1: memref<32x2x16x256xbf16, #tpu.memory_space<vmem>>, %arg2: memref<1x256xbf16, #tpu.memory_space<vmem>>, %arg3: memref<1x256xbf16, #tpu.memory_space<vmem>>, %arg4: memref<128x128xbf16, #tpu.memory_space<vmem>>, %arg5: memref<512x128xf32, #tpu.memory_space<vmem>>) attributes {dimension_semantics = [#tpu.dimension_semantics<parallel>], iteration_bounds = array<i64: 1>, scalar_prefetch = 0 : i64, scratch_operands = 0 : i64, tpu.core_type = #tpu.core_type<tc>, window_params = [{transform_indices = @transform_0, window_bounds = array<i64: 32, 2, 16, 256>}, {pipeline_mode = #tpu.pipeline_mode<synchronous>, transform_indices = @transform_1, window_bounds = array<i64: 1, 256>}, {pipeline_mode = #tpu.pipeline_mode<synchronous>, transform_indices = @transform_2, window_bounds = array<i64: 1, 256>}, {pipeline_mode = #tpu.pipeline_mode<synchronous>, transform_indices = @transform_3, window_bounds = array<i64: 128, 128>}, {transform_indices = @transform_4, window_bounds = array<i64: 512, 128>}]} {
    %c0 = arith.constant 0 : index
    %c0_0 = arith.constant 0 : index
    %c0_1 = arith.constant 0 : index
    %c0_2 = arith.constant 0 : index
    %0 = vector.load %arg1[%c0, %c0_0, %c0_1, %c0_2] : memref<32x2x16x256xbf16, #tpu.memory_space<vmem>>, vector<32x2x16x256xbf16>
    %c0_3 = arith.constant 0 : index
    %c0_4 = arith.constant 0 : index
    %1 = vector.load %arg2[%c0_3, %c0_4] : memref<1x256xbf16, #tpu.memory_space<vmem>>, vector<1x256xbf16>
    %c0_5 = arith.constant 0 : index
    %c0_6 = arith.constant 0 : index
    %2 = vector.load %arg3[%c0_5, %c0_6] : memref<1x256xbf16, #tpu.memory_space<vmem>>, vector<1x256xbf16>
    %3 = vector.shape_cast %1 : vector<1x256xbf16> to vector<1x1x1x256xbf16>
    %4 = vector.broadcast %3 : vector<1x1x1x256xbf16> to vector<32x2x16x256xbf16>
    %5 = arith.mulf %0, %4 : vector<32x2x16x256xbf16>
    %6 = vector.shape_cast %2 : vector<1x256xbf16> to vector<1x1x1x256xbf16>
    %7 = vector.broadcast %6 : vector<1x1x1x256xbf16> to vector<32x2x16x256xbf16>
    %8 = arith.addf %5, %7 : vector<32x2x16x256xbf16>
    %cst = arith.constant 0.000000e+00 : bf16
    %9 = vector.broadcast %cst : bf16 to vector<32x2x16x256xbf16>
    %10 = arith.maximumf %8, %9 : vector<32x2x16x256xbf16>
    %11 = vector.extract_strided_slice %10 {offsets = [0, 0, 0, 0], sizes = [32, 1, 16, 256], strides = [1, 1, 1, 1]} : vector<32x2x16x256xbf16> to vector<32x1x16x256xbf16>
    %12 = vector.shape_cast %11 : vector<32x1x16x256xbf16> to vector<32x16x256xbf16>
    %13 = vector.extract_strided_slice %10 {offsets = [0, 1, 0, 0], sizes = [32, 1, 16, 256], strides = [1, 1, 1, 1]} : vector<32x2x16x256xbf16> to vector<32x1x16x256xbf16>
    %14 = vector.shape_cast %13 : vector<32x1x16x256xbf16> to vector<32x16x256xbf16>
    %15 = arith.addf %12, %14 : vector<32x16x256xbf16>
    %16 = vector.extract_strided_slice %15 {offsets = [0, 0, 0], sizes = [32, 16, 128], strides = [1, 1, 1]} : vector<32x16x256xbf16> to vector<32x16x128xbf16>
    %17 = vector.extract_strided_slice %15 {offsets = [0, 0, 128], sizes = [32, 16, 128], strides = [1, 1, 1]} : vector<32x16x256xbf16> to vector<32x16x128xbf16>
    %18 = arith.addf %16, %17 : vector<32x16x128xbf16>
    %19 = vector.shape_cast %18 : vector<32x16x128xbf16> to vector<512x128xbf16>
    %c0_7 = arith.constant 0 : index
    %c0_8 = arith.constant 0 : index
    %20 = vector.load %arg4[%c0_7, %c0_8] : memref<128x128xbf16, #tpu.memory_space<vmem>>, vector<128x128xbf16>
    %cst_9 = arith.constant dense<0.000000e+00> : vector<512x128xf32>
    %21 = tpu.matmul %19, %20, %cst_9 {dimension_numbers = #tpu.dot_dimension_numbers<[1], [0], [0], [1], [0, 0, 1, 1], [], []>} : vector<512x128xbf16>, vector<128x128xbf16>, vector<512x128xf32> -> vector<512x128xf32>
    %c0_10 = arith.constant 0 : index
    %c0_11 = arith.constant 0 : index
    %22 = vector.load %arg5[%c0_10, %c0_11] : memref<512x128xf32, #tpu.memory_space<vmem>>, vector<512x128xf32>
    tpu.vector_store %arg5[%c0_10, %c0_11], %21 {strides = array<i32>} : memref<512x128xf32, #tpu.memory_space<vmem>>, vector<512x128xf32>,
    return
  }
  func.func @transform_0(%arg0: i32) -> (i32, i32, i32, i32) {
    %c0_i32 = arith.constant 0 : i32
    %c0_i32_0 = arith.constant 0 : i32
    %c0_i32_1 = arith.constant 0 : i32
    %c0_i32_2 = arith.constant 0 : i32
    return %arg0, %c0_i32, %c0_i32_0, %c0_i32_1 : i32, i32, i32, i32
  }
  func.func @transform_1(%arg0: i32) -> (i32, i32) {
    %c0_i32 = arith.constant 0 : i32
    %c0_i32_0 = arith.constant 0 : i32
    %c0_i32_1 = arith.constant 0 : i32
    return %c0_i32, %c0_i32_0 : i32, i32
  }
  func.func @transform_2(%arg0: i32) -> (i32, i32) {
    %c0_i32 = arith.constant 0 : i32
    %c0_i32_0 = arith.constant 0 : i32
    %c0_i32_1 = arith.constant 0 : i32
    return %c0_i32, %c0_i32_0 : i32, i32
  }
  func.func @transform_3(%arg0: i32) -> (i32, i32) {
    %c0_i32 = arith.constant 0 : i32
    %c0_i32_0 = arith.constant 0 : i32
    %c0_i32_1 = arith.constant 0 : i32
    return %c0_i32, %c0_i32_0 : i32, i32
  }
  func.func @transform_4(%arg0: i32) -> (i32, i32) {
    %c0_i32 = arith.constant 0 : i32
    %c0_i32_0 = arith.constant 0 : i32
    return %arg0, %c0_i32 : i32, i32
  }
}

</mosaic_0001>

<llo_original>
// kernel: transition_forward.1
$region0: #{transition_forward.1}
  #allocation0 [shape = 'u32[]', space=smem, size = 0x4, offset = 0x4, fixed_abs, tag = 'smem constant byte address 0x4 - core index']
  #allocation1 [shape = 'u32[144,128]{1,0:T(1,128)}', space=vmem, size = 0x12000, scoped, tag = 'internal scratch']
  %s0 = inlined_call_operand.hbm [shape: bf16[32,2,16,256], index: 0, kind: input, shape index: {}]
  %s1 = inlined_call_operand.hbm [shape: bf16[1,256], index: 1, kind: input, shape index: {}]
  %s2 = inlined_call_operand.hbm [shape: bf16[1,256], index: 2, kind: input, shape index: {}]
  %s3 = inlined_call_operand.hbm [shape: bf16[128,128], index: 3, kind: input, shape index: {}]
  %s4 = inlined_call_operand.hbm [shape: f32[512,128], index: 4, kind: output, shape index: {}]
  %s5 = sld [smem:[#allocation0]]
  $region42: #{transition_forward.1} parent=0
    _
  %s7 = ssub.s32 1, %s5
  %s8 = scalar_select 0, %s7, %s5
  $region1: #{transition_forward.1} parent=0
    #allocation2 [shape = 'u8[524288]{0}', space=vmem, size = 0x80000, scoped, tag = 'input window, operand 0, single buffered']
    #allocation3 [shape = 's32[1]{0}', space=sflag, size = 0x4, scoped, tag = 'scoped memory for transition_forward.1']
    #allocation4 [shape = 's32[1]{0}', space=sflag, size = 0x4, scoped, tag = 'scoped memory for transition_forward.1']
    #allocation5 [shape = 'u8[1024]{0}', space=vmem, size = 0x400, scoped, tag = 'input window, operand 1, single buffered']
    #allocation6 [shape = 's32[1]{0}', space=sflag, size = 0x4, scoped, tag = 'scoped memory for transition_forward.1']
    #allocation7 [shape = 'u8[1024]{0}', space=vmem, size = 0x400, scoped, tag = 'input window, operand 2, single buffered']
    #allocation8 [shape = 'u8[32768]{0}', space=vmem, size = 0x8000, scoped, tag = 'input window, operand 3, single buffered']
    #allocation9 [shape = 's32[1]{0}', space=sflag, size = 0x4, scoped, tag = 'scoped memory for transition_forward.1']
    #allocation10 [shape = 'u8[262144]{0}', space=vmem, size = 0x40000, scoped, tag = 'output window, operand 0, single buffered']
    %9 = vsyncpa [#allocation3], 0
    %10 = vsyncpa [#allocation6], 0
    %11 = vsyncpa [#allocation9], 0
    %12 = vsyncpa [#allocation4], 0
    // Predicated region
    $region2: #{transition_forward.1} parent=1 // pred_check
      _
    $region3: #{transition_forward.1} parent=1 // pred_check_branch
      %14 = sbr.rel (0) target = $region5
    $region4: #{transition_forward.1} parent=1 // pred_region
      %s16 = ssub.s32 16384, 16384
      %17 = vsyncadd [#allocation3], %s16
      %s18 = sshll.u32 [#allocation2], 4
      %s19 = int_to_ptr.vmem [resolvable:$true] %s18
      %24 = dma.hbm_to_vmem [thread:$0]  %s0, 16384, %s19, [#allocation3], 128, 128, 8
    $region5: #{transition_forward.1} parent=1 // pred_fallthru
      _
    // Predicated region
    $region6: #{transition_forward.1} parent=1 // pred_check
      _
    $region7: #{transition_forward.1} parent=1 // pred_check_branch
      %26 = sbr.rel (0) target = $region9
    $region8: #{transition_forward.1} parent=1 // pred_region
      %s28 = ssub.s32 32, 32
      %29 = vsyncadd [#allocation6], %s28
      %s31 = sshll.u32 [#allocation5], 4
      %s32 = int_to_ptr.vmem [resolvable:$true] %s31
      %34 = dma.hbm_to_vmem [thread:$0]  %s1, 32, %s32, [#allocation6]
    $region9: #{transition_forward.1} parent=1 // pred_fallthru
      _
    // Predicated region
    $region10: #{transition_forward.1} parent=1 // pred_check
      _
    $region11: #{transition_forward.1} parent=1 // pred_check_branch
      %36 = sbr.rel (0) target = $region13
    $region12: #{transition_forward.1} parent=1 // pred_region
      %s38 = ssub.s32 32, 32
      %39 = vsyncadd [#allocation6], %s38
      %s41 = sshll.u32 [#allocation7], 4
      %s42 = int_to_ptr.vmem [resolvable:$true] %s41
      %44 = dma.hbm_to_vmem [thread:$0]  %s2, 32, %s42, [#allocation6]
    $region13: #{transition_forward.1} parent=1 // pred_fallthru
      _
    // Predicated region
    $region14: #{transition_forward.1} parent=1 // pred_check
      _
    $region15: #{transition_forward.1} parent=1 // pred_check_branch
      %46 = sbr.rel (0) target = $region17
    $region16: #{transition_forward.1} parent=1 // pred_region
      %s48 = ssub.s32 1024, 1024
      %49 = vsyncadd [#allocation9], %s48
      %s50 = sshll.u32 [#allocation8], 4
      %s51 = int_to_ptr.vmem [resolvable:$true] %s50
      %56 = dma.hbm_to_vmem [thread:$0]  %s3, 1024, %s51, [#allocation9], 64, 64, 4
    $region17: #{transition_forward.1} parent=1 // pred_fallthru
      _
    // Predicated region
    $region18: #{transition_forward.1} parent=1 // pred_check
      _
    $region19: #{transition_forward.1} parent=1 // pred_check_branch
      %58 = sbr.rel (0) target = $region21
    $region20: #{transition_forward.1} parent=1 // pred_region
      %59 = dma.done [#allocation3], 16384
    $region21: #{transition_forward.1} parent=1 // pred_fallthru
      _
    // Predicated region
    $region22: #{transition_forward.1} parent=1 // pred_check
      _
    $region23: #{transition_forward.1} parent=1 // pred_check_branch
      %61 = sbr.rel (0) target = $region25
    $region24: #{transition_forward.1} parent=1 // pred_region
      %62 = dma.done [#allocation6], 32
    $region25: #{transition_forward.1} parent=1 // pred_fallthru
      _
    // Predicated region
    $region26: #{transition_forward.1} parent=1 // pred_check
      _
    $region27: #{transition_forward.1} parent=1 // pred_check_branch
      %64 = sbr.rel (0) target = $region29
    $region28: #{transition_forward.1} parent=1 // pred_region
      %65 = dma.done [#allocation6], 32
    $region29: #{transition_forward.1} parent=1 // pred_fallthru
      _
    // Predicated region
    $region30: #{transition_forward.1} parent=1 // pred_check
      _
    $region31: #{transition_forward.1} parent=1 // pred_check_branch
      %67 = sbr.rel (0) target = $region33
    $region32: #{transition_forward.1} parent=1 // pred_region
      %68 = dma.done [#allocation9], 1024
    $region33: #{transition_forward.1} parent=1 // pred_fallthru
      _
    %v70 = vld [vmem:[#allocation2] sm:$0xff]
    %v71 = vld [vmem:[#allocation2 + $0x8] sm:$0xff]
    %v72 = vld [vmem:[#allocation2 + $0x10] sm:$0xff]
    %v73 = vld [vmem:[#allocation2 + $0x18] sm:$0xff]
    %v74 = vld [vmem:[#allocation2 + $0x20] sm:$0xff]
    %v75 = vld [vmem:[#allocation2 + $0x28] sm:$0xff]
    %v76 = vld [vmem:[#allocation2 + $0x30] sm:$0xff]
    %v77 = vld [vmem:[#allocation2 + $0x38] sm:$0xff]
    %v78 = vld [vmem:[#allocation2 + $0x40] sm:$0xff]
    %v79 = vld [vmem:[#allocation2 + $0x48] sm:$0xff]
    %v80 = vld [vmem:[#allocation2 + $0x50] sm:$0xff]
    %v81 = vld [vmem:[#allocation2 + $0x58] sm:$0xff]
    %v82 = vld [vmem:[#allocation2 + $0x60] sm:$0xff]
    %v83 = vld [vmem:[#allocation2 + $0x68] sm:$0xff]
    %v84 = vld [vmem:[#allocation2 + $0x70] sm:$0xff]
    %v85 = vld [vmem:[#allocation2 + $0x78] sm:$0xff]
    %v86 = vld [vmem:[#allocation2 + $0x80] sm:$0xff]
    %v87 = vld [vmem:[#allocation2 + $0x88] sm:$0xff]
    %v88 = vld [vmem:[#allocation2 + $0x90] sm:$0xff]
    %v89 = vld [vmem:[#allocation2 + $0x98] sm:$0xff]
    %v90 = vld [vmem:[#allocation2 + $0xa0] sm:$0xff]
    %v91 = vld [vmem:[#allocation2 + $0xa8] sm:$0xff]
    %v92 = vld [vmem:[#allocation2 + $0xb0] sm:$0xff]
    %v93 = vld [vmem:[#allocation2 + $0xb8] sm:$0xff]
    %v94 = vld [vmem:[#allocation2 + $0xc0] sm:$0xff]
    %v95 = vld [vmem:[#allocation2 + $0xc8] sm:$0xff]
    %v96 = vld [vmem:[#allocation2 + $0xd0] sm:$0xff]
    %v97 = vld [vmem:[#allocation2 + $0xd8] sm:$0xff]
    %v98 = vld [vmem:[#allocation2 + $0xe0] sm:$0xff]
    %v99 = vld [vmem:[#allocation2 + $0xe8] sm:$0xff]
    %v100 = vld [vmem:[#allocation2 + $0xf0] sm:$0xff]
    %v101 = vld [vmem:[#allocation2 + $0xf8] sm:$0xff]
    %v102 = vld [vmem:[#allocation2 + $0x100] sm:$0xff]
    %v103 = vld [vmem:[#allocation2 + $0x108] sm:$0xff]
    %v104 = vld [vmem:[#allocation2 + $0x110] sm:$0xff]
    %v105 = vld [vmem:[#allocation2 + $0x118] sm:$0xff]
    %v106 = vld [vmem:[#allocation2 + $0x120] sm:$0xff]
    %v107 = vld [vmem:[#allocation2 + $0x128] sm:$0xff]
    %v108 = vld [vmem:[#allocation2 + $0x130] sm:$0xff]
    %v109 = vld [vmem:[#allocation2 + $0x138] sm:$0xff]
    %v110 = vld [vmem:[#allocation2 + $0x140] sm:$0xff]
    %v111 = vld [vmem:[#allocation2 + $0x148] sm:$0xff]
    %v112 = vld [vmem:[#allocation2 + $0x150] sm:$0xff]
    %v113 = vld [vmem:[#allocation2 + $0x158] sm:$0xff]
    %v114 = vld [vmem:[#allocation2 + $0x160] sm:$0xff]
    %v115 = vld [vmem:[#allocation2 + $0x168] sm:$0xff]
    %v116 = vld [vmem:[#allocation2 + $0x170] sm:$0xff]
    %v117 = vld [vmem:[#allocation2 + $0x178] sm:$0xff]
    %v118 = vld [vmem:[#allocation2 + $0x180] sm:$0xff]
    %v119 = vld [vmem:[#allocation2 + $0x188] sm:$0xff]
    %v120 = vld [vmem:[#allocation2 + $0x190] sm:$0xff]
    %v121 = vld [vmem:[#allocation2 + $0x198] sm:$0xff]
    %v122 = vld [vmem:[#allocation2 + $0x1a0] sm:$0xff]
    %v123 = vld [vmem:[#allocation2 + $0x1a8] sm:$0xff]
    %v124 = vld [vmem:[#allocation2 + $0x1b0] sm:$0xff]
    %v125 = vld [vmem:[#allocation2 + $0x1b8] sm:$0xff]
    %v126 = vld [vmem:[#allocation2 + $0x1c0] sm:$0xff]
    %v127 = vld [vmem:[#allocation2 + $0x1c8] sm:$0xff]
    %v128 = vld [vmem:[#allocation2 + $0x1d0] sm:$0xff]
    %v129 = vld [vmem:[#allocation2 + $0x1d8] sm:$0xff]
    %v130 = vld [vmem:[#allocation2 + $0x1e0] sm:$0xff]
    %v131 = vld [vmem:[#allocation2 + $0x1e8] sm:$0xff]
    %v132 = vld [vmem:[#allocation2 + $0x1f0] sm:$0xff]
    %v133 = vld [vmem:[#allocation2 + $0x1f8] sm:$0xff]
    %v134 = vld [vmem:[#allocation2 + $0x200] sm:$0xff]
    %v135 = vld [vmem:[#allocation2 + $0x208] sm:$0xff]
    %v136 = vld [vmem:[#allocation2 + $0x210] sm:$0xff]
    %v137 = vld [vmem:[#allocation2 + $0x218] sm:$0xff]
    %v138 = vld [vmem:[#allocation2 + $0x220] sm:$0xff]
    %v139 = vld [vmem:[#allocation2 + $0x228] sm:$0xff]
    %v140 = vld [vmem:[#allocation2 + $0x230] sm:$0xff]
    %v141 = vld [vmem:[#allocation2 + $0x238] sm:$0xff]
    %v142 = vld [vmem:[#allocation2 + $0x240] sm:$0xff]
    %v143 = vld [vmem:[#allocation2 + $0x248] sm:$0xff]
    %v144 = vld [vmem:[#allocation2 + $0x250] sm:$0xff]
    %v145 = vld [vmem:[#allocation2 + $0x258] sm:$0xff]
    %v146 = vld [vmem:[#allocation2 + $0x260] sm:$0xff]
    %v147 = vld [vmem:[#allocation2 + $0x268] sm:$0xff]
    %v148 = vld [vmem:[#allocation2 + $0x270] sm:$0xff]
    %v149 = vld [vmem:[#allocation2 + $0x278] sm:$0xff]
    %v150 = vld [vmem:[#allocation2 + $0x280] sm:$0xff]
    %v151 = vld [vmem:[#allocation2 + $0x288] sm:$0xff]
    %v152 = vld [vmem:[#allocation2 + $0x290] sm:$0xff]
    %v153 = vld [vmem:[#allocation2 + $0x298] sm:$0xff]
    %v154 = vld [vmem:[#allocation2 + $0x2a0] sm:$0xff]
    %v155 = vld [vmem:[#allocation2 + $0x2a8] sm:$0xff]
    %v156 = vld [vmem:[#allocation2 + $0x2b0] sm:$0xff]
    %v157 = vld [vmem:[#allocation2 + $0x2b8] sm:$0xff]
    %v158 = vld [vmem:[#allocation2 + $0x2c0] sm:$0xff]
    %v159 = vld [vmem:[#allocation2 + $0x2c8] sm:$0xff]
    %v160 = vld [vmem:[#allocation2 + $0x2d0] sm:$0xff]
    %v161 = vld [vmem:[#allocation2 + $0x2d8] sm:$0xff]
    %v162 = vld [vmem:[#allocation2 + $0x2e0] sm:$0xff]
    %v163 = vld [vmem:[#allocation2 + $0x2e8] sm:$0xff]
    %v164 = vld [vmem:[#allocation2 + $0x2f0] sm:$0xff]
    %v165 = vld [vmem:[#allocation2 + $0x2f8] sm:$0xff]
    %v166 = vld [vmem:[#allocation2 + $0x300] sm:$0xff]
    %v167 = vld [vmem:[#allocation2 + $0x308] sm:$0xff]
    %v168 = vld [vmem:[#allocation2 + $0x310] sm:$0xff]
    %v169 = vld [vmem:[#allocation2 + $0x318] sm:$0xff]
    %v170 = vld [vmem:[#allocation2 + $0x320] sm:$0xff]
    %v171 = vld [vmem:[#allocation2 + $0x328] sm:$0xff]
    %v172 = vld [vmem:[#allocation2 + $0x330] sm:$0xff]
    %v173 = vld [vmem:[#allocation2 + $0x338] sm:$0xff]
    %v174 = vld [vmem:[#allocation2 + $0x340] sm:$0xff]
    %v175 = vld [vmem:[#allocation2 + $0x348] sm:$0xff]
    %v176 = vld [vmem:[#allocation2 + $0x350] sm:$0xff]
    %v177 = vld [vmem:[#allocation2 + $0x358] sm:$0xff]
    %v178 = vld [vmem:[#allocation2 + $0x360] sm:$0xff]
    %v179 = vld [vmem:[#allocation2 + $0x368] sm:$0xff]
    %v180 = vld [vmem:[#allocation2 + $0x370] sm:$0xff]
    %v181 = vld [vmem:[#allocation2 + $0x378] sm:$0xff]
    %v182 = vld [vmem:[#allocation2 + $0x380] sm:$0xff]
    %v183 = vld [vmem:[#allocation2 + $0x388] sm:$0xff]
    %v184 = vld [vmem:[#allocation2 + $0x390] sm:$0xff]
    %v185 = vld [vmem:[#allocation2 + $0x398] sm:$0xff]
    %v186 = vld [vmem:[#allocation2 + $0x3a0] sm:$0xff]
    %v187 = vld [vmem:[#allocation2 + $0x3a8] sm:$0xff]
    %v188 = vld [vmem:[#allocation2 + $0x3b0] sm:$0xff]
    %v189 = vld [vmem:[#allocation2 + $0x3b8] sm:$0xff]
    %v190 = vld [vmem:[#allocation2 + $0x3c0] sm:$0xff]
    %v191 = vld [vmem:[#allocation2 + $0x3c8] sm:$0xff]
    %v192 = vld [vmem:[#allocation2 + $0x3d0] sm:$0xff]
    %v193 = vld [vmem:[#allocation2 + $0x3d8] sm:$0xff]
    %v194 = vld [vmem:[#allocation2 + $0x3e0] sm:$0xff]
    %v195 = vld [vmem:[#allocation2 + $0x3e8] sm:$0xff]
    %v196 = vld [vmem:[#allocation2 + $0x3f0] sm:$0xff]
    %v197 = vld [vmem:[#allocation2 + $0x3f8] sm:$0xff]
    %v198 = vld [vmem:[#allocation5] sm:$0x3]
    %v199 = vld [vmem:[#allocation7] sm:$0x3]
    %v202 = vunpack.c.l.s4 1966171168
    %v203 = vunpack.c.0.s8 %v202
    %v204 = vlaneseq
    %v205 = vshrl.u32 %v204, 7
    %v206 = vsub.s32 %v203, %v205
    %v207 = vrot.slane %v198, %v206
    %v208 = vcombine.high %v207, %v207
    %v210 = vunpack.c.l.s4 1966171168
    %v211 = vunpack.c.0.s8 %v210
    %v212 = vlaneseq
    %v213 = vshrl.u32 %v212, 7
    %v214 = vsub.s32 %v211, %v213
    %v215 = vrot.slane %v207, %v214
    %v217 = vunpack.c.l.s4 1966171168
    %v218 = vunpack.c.0.s8 %v217
    %v219 = vlaneseq
    %v220 = vshrl.u32 %v219, 7
    %v221 = vsub.s32 %v218, %v220
    %v222 = vrot.slane %v208, %v221
    %v224 = vpack.i.b16 %v215, %v215
    %v226 = vlaneseq
    %v227 = vshrl.u32 %v226, 7
    %v228 = vsub.s32 0, %v227
    %v229 = vrot.slane %v224, %v228
    %v231 = vpack.i.b16 %v222, %v222
    %v233 = vlaneseq
    %v234 = vshrl.u32 %v233, 7
    %v235 = vsub.s32 0, %v234
    %v236 = vrot.slane %v231, %v235
    %v239 = vunpack.c.l.b16 %v229
    %v240 = vunpack.c.l.b16 %v236
    %v241 = vpack.c.b16 %v240, %v239
    %v243 = vmul.bf16 %v70, %v241
    %v244 = vmul.bf16 %v71, %v241
    %v245 = vmul.bf16 %v72, %v241
    %v246 = vmul.bf16 %v73, %v241
    %v247 = vmul.bf16 %v74, %v241
    %v248 = vmul.bf16 %v75, %v241
    %v249 = vmul.bf16 %v76, %v241
    %v250 = vmul.bf16 %v77, %v241
    %v251 = vmul.bf16 %v78, %v241
    %v252 = vmul.bf16 %v79, %v241
    %v253 = vmul.bf16 %v80, %v241
    %v254 = vmul.bf16 %v81, %v241
    %v255 = vmul.bf16 %v82, %v241
    %v256 = vmul.bf16 %v83, %v241
    %v257 = vmul.bf16 %v84, %v241
    %v258 = vmul.bf16 %v85, %v241
    %v259 = vmul.bf16 %v86, %v241
    %v260 = vmul.bf16 %v87, %v241
    %v261 = vmul.bf16 %v88, %v241
    %v262 = vmul.bf16 %v89, %v241
    %v263 = vmul.bf16 %v90, %v241
    %v264 = vmul.bf16 %v91, %v241
    %v265 = vmul.bf16 %v92, %v241
    %v266 = vmul.bf16 %v93, %v241
    %v267 = vmul.bf16 %v94, %v241
    %v268 = vmul.bf16 %v95, %v241
    %v269 = vmul.bf16 %v96, %v241
    %v270 = vmul.bf16 %v97, %v241
    %v271 = vmul.bf16 %v98, %v241
    %v272 = vmul.bf16 %v99, %v241
    %v273 = vmul.bf16 %v100, %v241
    %v274 = vmul.bf16 %v101, %v241
    %v275 = vmul.bf16 %v102, %v241
    %v276 = vmul.bf16 %v103, %v241
    %v277 = vmul.bf16 %v104, %v241
    %v278 = vmul.bf16 %v105, %v241
    %v279 = vmul.bf16 %v106, %v241
    %v280 = vmul.bf16 %v107, %v241
    %v281 = vmul.bf16 %v108, %v241
    %v282 = vmul.bf16 %v109, %v241
    %v283 = vmul.bf16 %v110, %v241
    %v284 = vmul.bf16 %v111, %v241
    %v285 = vmul.bf16 %v112, %v241
    %v286 = vmul.bf16 %v113, %v241
    %v287 = vmul.bf16 %v114, %v241
    %v288 = vmul.bf16 %v115, %v241
    %v289 = vmul.bf16 %v116, %v241
    %v290 = vmul.bf16 %v117, %v241
    %v291 = vmul.bf16 %v118, %v241
    %v292 = vmul.bf16 %v119, %v241
    %v293 = vmul.bf16 %v120, %v241
    %v294 = vmul.bf16 %v121, %v241
    %v295 = vmul.bf16 %v122, %v241
    %v296 = vmul.bf16 %v123, %v241
    %v297 = vmul.bf16 %v124, %v241
    %v298 = vmul.bf16 %v125, %v241
    %v299 = vmul.bf16 %v126, %v241
    %v300 = vmul.bf16 %v127, %v241
    %v301 = vmul.bf16 %v128, %v241
    %v302 = vmul.bf16 %v129, %v241
    %v303 = vmul.bf16 %v130, %v241
    %v304 = vmul.bf16 %v131, %v241
    %v305 = vmul.bf16 %v132, %v241
    %v306 = vmul.bf16 %v133, %v241
    %v307 = vmul.bf16 %v134, %v241
    %v308 = vmul.bf16 %v135, %v241
    %v309 = vmul.bf16 %v136, %v241
    %v310 = vmul.bf16 %v137, %v241
    %v311 = vmul.bf16 %v138, %v241
    %v312 = vmul.bf16 %v139, %v241
    %v313 = vmul.bf16 %v140, %v241
    %v314 = vmul.bf16 %v141, %v241
    %v315 = vmul.bf16 %v142, %v241
    %v316 = vmul.bf16 %v143, %v241
    %v317 = vmul.bf16 %v144, %v241
    %v318 = vmul.bf16 %v145, %v241
    %v319 = vmul.bf16 %v146, %v241
    %v320 = vmul.bf16 %v147, %v241
    %v321 = vmul.bf16 %v148, %v241
    %v322 = vmul.bf16 %v149, %v241
    %v323 = vmul.bf16 %v150, %v241
    %v324 = vmul.bf16 %v151, %v241
    %v325 = vmul.bf16 %v152, %v241
    %v326 = vmul.bf16 %v153, %v241
    %v327 = vmul.bf16 %v154, %v241
    %v328 = vmul.bf16 %v155, %v241
    %v329 = vmul.bf16 %v156, %v241
    %v330 = vmul.bf16 %v157, %v241
    %v331 = vmul.bf16 %v158, %v241
    %v332 = vmul.bf16 %v159, %v241
    %v333 = vmul.bf16 %v160, %v241
    %v334 = vmul.bf16 %v161, %v241
    %v335 = vmul.bf16 %v162, %v241
    %v336 = vmul.bf16 %v163, %v241
    %v337 = vmul.bf16 %v164, %v241
    %v338 = vmul.bf16 %v165, %v241
    %v339 = vmul.bf16 %v166, %v241
    %v340 = vmul.bf16 %v167, %v241
    %v341 = vmul.bf16 %v168, %v241
    %v342 = vmul.bf16 %v169, %v241
    %v343 = vmul.bf16 %v170, %v241
    %v344 = vmul.bf16 %v171, %v241
    %v345 = vmul.bf16 %v172, %v241
    %v346 = vmul.bf16 %v173, %v241
    %v347 = vmul.bf16 %v174, %v241
    %v348 = vmul.bf16 %v175, %v241
    %v349 = vmul.bf16 %v176, %v241
    %v350 = vmul.bf16 %v177, %v241
    %v351 = vmul.bf16 %v178, %v241
    %v352 = vmul.bf16 %v179, %v241
    %v353 = vmul.bf16 %v180, %v241
    %v354 = vmul.bf16 %v181, %v241
    %v355 = vmul.bf16 %v182, %v241
    %v356 = vmul.bf16 %v183, %v241
    %v357 = vmul.bf16 %v184, %v241
    %v358 = vmul.bf16 %v185, %v241
    %v359 = vmul.bf16 %v186, %v241
    %v360 = vmul.bf16 %v187, %v241
    %v361 = vmul.bf16 %v188, %v241
    %v362 = vmul.bf16 %v189, %v241
    %v363 = vmul.bf16 %v190, %v241
    %v364 = vmul.bf16 %v191, %v241
    %v365 = vmul.bf16 %v192, %v241
    %v366 = vmul.bf16 %v193, %v241
    %v367 = vmul.bf16 %v194, %v241
    %v368 = vmul.bf16 %v195, %v241
    %v369 = vmul.bf16 %v196, %v241
    %v370 = vmul.bf16 %v197, %v241
    %v373 = vunpack.c.l.s4 1966171168
    %v374 = vunpack.c.0.s8 %v373
    %v375 = vlaneseq
    %v376 = vshrl.u32 %v375, 7
    %v377 = vsub.s32 %v374, %v376
    %v378 = vrot.slane %v199, %v377
    %v379 = vcombine.high %v378, %v378
    %v381 = vunpack.c.l.s4 1966171168
    %v382 = vunpack.c.0.s8 %v381
    %v383 = vlaneseq
    %v384 = vshrl.u32 %v383, 7
    %v385 = vsub.s32 %v382, %v384
    %v386 = vrot.slane %v378, %v385
    %v388 = vunpack.c.l.s4 1966171168
    %v389 = vunpack.c.0.s8 %v388
    %v390 = vlaneseq
    %v391 = vshrl.u32 %v390, 7
    %v392 = vsub.s32 %v389, %v391
    %v393 = vrot.slane %v379, %v392
    %v395 = vpack.i.b16 %v386, %v386
    %v397 = vlaneseq
    %v398 = vshrl.u32 %v397, 7
    %v399 = vsub.s32 0, %v398
    %v400 = vrot.slane %v395, %v399
    %v402 = vpack.i.b16 %v393, %v393
    %v404 = vlaneseq
    %v405 = vshrl.u32 %v404, 7
    %v406 = vsub.s32 0, %v405
    %v407 = vrot.slane %v402, %v406
    %v410 = vunpack.c.l.b16 %v400
    %v411 = vunpack.c.l.b16 %v407
    %v412 = vpack.c.b16 %v411, %v410
    %v414 = vadd.bf16 %v243, %v412
    %v415 = vadd.bf16 %v244, %v412
    %v416 = vadd.bf16 %v245, %v412
    %v417 = vadd.bf16 %v246, %v412
    %v418 = vadd.bf16 %v247, %v412
    %v419 = vadd.bf16 %v248, %v412
    %v420 = vadd.bf16 %v249, %v412
    %v421 = vadd.bf16 %v250, %v412
    %v422 = vadd.bf16 %v251, %v412
    %v423 = vadd.bf16 %v252, %v412
    %v424 = vadd.bf16 %v253, %v412
    %v425 = vadd.bf16 %v254, %v412
    %v426 = vadd.bf16 %v255, %v412
    %v427 = vadd.bf16 %v256, %v412
    %v428 = vadd.bf16 %v257, %v412
    %v429 = vadd.bf16 %v258, %v412
    %v430 = vadd.bf16 %v259, %v412
    %v431 = vadd.bf16 %v260, %v412
    %v432 = vadd.bf16 %v261, %v412
    %v433 = vadd.bf16 %v262, %v412
    %v434 = vadd.bf16 %v263, %v412
    %v435 = vadd.bf16 %v264, %v412
    %v436 = vadd.bf16 %v265, %v412
    %v437 = vadd.bf16 %v266, %v412
    %v438 = vadd.bf16 %v267, %v412
    %v439 = vadd.bf16 %v268, %v412
    %v440 = vadd.bf16 %v269, %v412
    %v441 = vadd.bf16 %v270, %v412
    %v442 = vadd.bf16 %v271, %v412
    %v443 = vadd.bf16 %v272, %v412
    %v444 = vadd.bf16 %v273, %v412
    %v445 = vadd.bf16 %v274, %v412
    %v446 = vadd.bf16 %v275, %v412
    %v447 = vadd.bf16 %v276, %v412
    %v448 = vadd.bf16 %v277, %v412
    %v449 = vadd.bf16 %v278, %v412
    %v450 = vadd.bf16 %v279, %v412
    %v451 = vadd.bf16 %v280, %v412
    %v452 = vadd.bf16 %v281, %v412
    %v453 = vadd.bf16 %v282, %v412
    %v454 = vadd.bf16 %v283, %v412
    %v455 = vadd.bf16 %v284, %v412
    %v456 = vadd.bf16 %v285, %v412
    %v457 = vadd.bf16 %v286, %v412
    %v458 = vadd.bf16 %v287, %v412
    %v459 = vadd.bf16 %v288, %v412
    %v460 = vadd.bf16 %v289, %v412
    %v461 = vadd.bf16 %v290, %v412
    %v462 = vadd.bf16 %v291, %v412
    %v463 = vadd.bf16 %v292, %v412
    %v464 = vadd.bf16 %v293, %v412
    %v465 = vadd.bf16 %v294, %v412
    %v466 = vadd.bf16 %v295, %v412
    %v467 = vadd.bf16 %v296, %v412
    %v468 = vadd.bf16 %v297, %v412
    %v469 = vadd.bf16 %v298, %v412
    %v470 = vadd.bf16 %v299, %v412
    %v471 = vadd.bf16 %v300, %v412
    %v472 = vadd.bf16 %v301, %v412
    %v473 = vadd.bf16 %v302, %v412
    %v474 = vadd.bf16 %v303, %v412
    %v475 = vadd.bf16 %v304, %v412
    %v476 = vadd.bf16 %v305, %v412
    %v477 = vadd.bf16 %v306, %v412
    %v478 = vadd.bf16 %v307, %v412
    %v479 = vadd.bf16 %v308, %v412
    %v480 = vadd.bf16 %v309, %v412
    %v481 = vadd.bf16 %v310, %v412
    %v482 = vadd.bf16 %v311, %v412
    %v483 = vadd.bf16 %v312, %v412
    %v484 = vadd.bf16 %v313, %v412
    %v485 = vadd.bf16 %v314, %v412
    %v486 = vadd.bf16 %v315, %v412
    %v487 = vadd.bf16 %v316, %v412
    %v488 = vadd.bf16 %v317, %v412
    %v489 = vadd.bf16 %v318, %v412
    %v490 = vadd.bf16 %v319, %v412
    %v491 = vadd.bf16 %v320, %v412
    %v492 = vadd.bf16 %v321, %v412
    %v493 = vadd.bf16 %v322, %v412
    %v494 = vadd.bf16 %v323, %v412
    %v495 = vadd.bf16 %v324, %v412
    %v496 = vadd.bf16 %v325, %v412
    %v497 = vadd.bf16 %v326, %v412
    %v498 = vadd.bf16 %v327, %v412
    %v499 = vadd.bf16 %v328, %v412
    %v500 = vadd.bf16 %v329, %v412
    %v501 = vadd.bf16 %v330, %v412
    %v502 = vadd.bf16 %v331, %v412
    %v503 = vadd.bf16 %v332, %v412
    %v504 = vadd.bf16 %v333, %v412
    %v505 = vadd.bf16 %v334, %v412
    %v506 = vadd.bf16 %v335, %v412
    %v507 = vadd.bf16 %v336, %v412
    %v508 = vadd.bf16 %v337, %v412
    %v509 = vadd.bf16 %v338, %v412
    %v510 = vadd.bf16 %v339, %v412
    %v511 = vadd.bf16 %v340, %v412
    %v512 = vadd.bf16 %v341, %v412
    %v513 = vadd.bf16 %v342, %v412
    %v514 = vadd.bf16 %v343, %v412
    %v515 = vadd.bf16 %v344, %v412
    %v516 = vadd.bf16 %v345, %v412
    %v517 = vadd.bf16 %v346, %v412
    %v518 = vadd.bf16 %v347, %v412
    %v519 = vadd.bf16 %v348, %v412
    %v520 = vadd.bf16 %v349, %v412
    %v521 = vadd.bf16 %v350, %v412
    %v522 = vadd.bf16 %v351, %v412
    %v523 = vadd.bf16 %v352, %v412
    %v524 = vadd.bf16 %v353, %v412
    %v525 = vadd.bf16 %v354, %v412
    %v526 = vadd.bf16 %v355, %v412
    %v527 = vadd.bf16 %v356, %v412
    %v528 = vadd.bf16 %v357, %v412
    %v529 = vadd.bf16 %v358, %v412
    %v530 = vadd.bf16 %v359, %v412
    %v531 = vadd.bf16 %v360, %v412
    %v532 = vadd.bf16 %v361, %v412
    %v533 = vadd.bf16 %v362, %v412
    %v534 = vadd.bf16 %v363, %v412
    %v535 = vadd.bf16 %v364, %v412
    %v536 = vadd.bf16 %v365, %v412
    %v537 = vadd.bf16 %v366, %v412
    %v538 = vadd.bf16 %v367, %v412
    %v539 = vadd.bf16 %v368, %v412
    %v540 = vadd.bf16 %v369, %v412
    %v541 = vadd.bf16 %v370, %v412
    %v542 = vmax.bf16 %v414, 0
    %v543 = vmax.bf16 %v415, 0
    %v544 = vmax.bf16 %v416, 0
    %v545 = vmax.bf16 %v417, 0
    %v546 = vmax.bf16 %v418, 0
    %v547 = vmax.bf16 %v419, 0
    %v548 = vmax.bf16 %v420, 0
    %v549 = vmax.bf16 %v421, 0
    %v550 = vmax.bf16 %v422, 0
    %v551 = vmax.bf16 %v423, 0
    %v552 = vmax.bf16 %v424, 0
    %v553 = vmax.bf16 %v425, 0
    %v554 = vmax.bf16 %v426, 0
    %v555 = vmax.bf16 %v427, 0
    %v556 = vmax.bf16 %v428, 0
    %v557 = vmax.bf16 %v429, 0
    %v558 = vmax.bf16 %v430, 0
    %v559 = vmax.bf16 %v431, 0
    %v560 = vmax.bf16 %v432, 0
    %v561 = vmax.bf16 %v433, 0
    %v562 = vmax.bf16 %v434, 0
    %v563 = vmax.bf16 %v435, 0
    %v564 = vmax.bf16 %v436, 0
    %v565 = vmax.bf16 %v437, 0
    %v566 = vmax.bf16 %v438, 0
    %v567 = vmax.bf16 %v439, 0
    %v568 = vmax.bf16 %v440, 0
    %v569 = vmax.bf16 %v441, 0
    %v570 = vmax.bf16 %v442, 0
    %v571 = vmax.bf16 %v443, 0
    %v572 = vmax.bf16 %v444, 0
    %v573 = vmax.bf16 %v445, 0
    %v574 = vmax.bf16 %v446, 0
    %v575 = vmax.bf16 %v447, 0
    %v576 = vmax.bf16 %v448, 0
    %v577 = vmax.bf16 %v449, 0
    %v578 = vmax.bf16 %v450, 0
    %v579 = vmax.bf16 %v451, 0
    %v580 = vmax.bf16 %v452, 0
    %v581 = vmax.bf16 %v453, 0
    %v582 = vmax.bf16 %v454, 0
    %v583 = vmax.bf16 %v455, 0
    %v584 = vmax.bf16 %v456, 0
    %v585 = vmax.bf16 %v457, 0
    %v586 = vmax.bf16 %v458, 0
    %v587 = vmax.bf16 %v459, 0
    %v588 = vmax.bf16 %v460, 0
    %v589 = vmax.bf16 %v461, 0
    %v590 = vmax.bf16 %v462, 0
    %v591 = vmax.bf16 %v463, 0
    %v592 = vmax.bf16 %v464, 0
    %v593 = vmax.bf16 %v465, 0
    %v594 = vmax.bf16 %v466, 0
    %v595 = vmax.bf16 %v467, 0
    %v596 = vmax.bf16 %v468, 0
    %v597 = vmax.bf16 %v469, 0
    %v598 = vmax.bf16 %v470, 0
    %v599 = vmax.bf16 %v471, 0
    %v600 = vmax.bf16 %v472, 0
    %v601 = vmax.bf16 %v473, 0
    %v602 = vmax.bf16 %v474, 0
    %v603 = vmax.bf16 %v475, 0
    %v604 = vmax.bf16 %v476, 0
    %v605 = vmax.bf16 %v477, 0
    %v606 = vmax.bf16 %v478, 0
    %v607 = vmax.bf16 %v479, 0
    %v608 = vmax.bf16 %v480, 0
    %v609 = vmax.bf16 %v481, 0
    %v610 = vmax.bf16 %v482, 0
    %v611 = vmax.bf16 %v483, 0
    %v612 = vmax.bf16 %v484, 0
    %v613 = vmax.bf16 %v485, 0
    %v614 = vmax.bf16 %v486, 0
    %v615 = vmax.bf16 %v487, 0
    %v616 = vmax.bf16 %v488, 0
    %v617 = vmax.bf16 %v489, 0
    %v618 = vmax.bf16 %v490, 0
    %v619 = vmax.bf16 %v491, 0
    %v620 = vmax.bf16 %v492, 0
    %v621 = vmax.bf16 %v493, 0
    %v622 = vmax.bf16 %v494, 0
    %v623 = vmax.bf16 %v495, 0
    %v624 = vmax.bf16 %v496, 0
    %v625 = vmax.bf16 %v497, 0
    %v626 = vmax.bf16 %v498, 0
    %v627 = vmax.bf16 %v499, 0
    %v628 = vmax.bf16 %v500, 0
    %v629 = vmax.bf16 %v501, 0
    %v630 = vmax.bf16 %v502, 0
    %v631 = vmax.bf16 %v503, 0
    %v632 = vmax.bf16 %v504, 0
    %v633 = vmax.bf16 %v505, 0
    %v634 = vmax.bf16 %v506, 0
    %v635 = vmax.bf16 %v507, 0
    %v636 = vmax.bf16 %v508, 0
    %v637 = vmax.bf16 %v509, 0
    %v638 = vmax.bf16 %v510, 0
    %v639 = vmax.bf16 %v511, 0
    %v640 = vmax.bf16 %v512, 0
    %v641 = vmax.bf16 %v513, 0
    %v642 = vmax.bf16 %v514, 0
    %v643 = vmax.bf16 %v515, 0
    %v644 = vmax.bf16 %v516, 0
    %v645 = vmax.bf16 %v517, 0
    %v646 = vmax.bf16 %v518, 0
    %v647 = vmax.bf16 %v519, 0
    %v648 = vmax.bf16 %v520, 0
    %v649 = vmax.bf16 %v521, 0
    %v650 = vmax.bf16 %v522, 0
    %v651 = vmax.bf16 %v523, 0
    %v652 = vmax.bf16 %v524, 0
    %v653 = vmax.bf16 %v525, 0
    %v654 = vmax.bf16 %v526, 0
    %v655 = vmax.bf16 %v527, 0
    %v656 = vmax.bf16 %v528, 0
    %v657 = vmax.bf16 %v529, 0
    %v658 = vmax.bf16 %v530, 0
    %v659 = vmax.bf16 %v531, 0
    %v660 = vmax.bf16 %v532, 0
    %v661 = vmax.bf16 %v533, 0
    %v662 = vmax.bf16 %v534, 0
    %v663 = vmax.bf16 %v535, 0
    %v664 = vmax.bf16 %v536, 0
    %v665 = vmax.bf16 %v537, 0
    %v666 = vmax.bf16 %v538, 0
    %v667 = vmax.bf16 %v539, 0
    %v668 = vmax.bf16 %v540, 0
    %v669 = vmax.bf16 %v541, 0
    %v670 = vadd.bf16 %v542, %v544
    %v671 = vadd.bf16 %v543, %v545
    %v672 = vadd.bf16 %v546, %v548
    %v673 = vadd.bf16 %v547, %v549
    %v674 = vadd.bf16 %v550, %v552
    %v675 = vadd.bf16 %v551, %v553
    %v676 = vadd.bf16 %v554, %v556
    %v677 = vadd.bf16 %v555, %v557
    %v678 = vadd.bf16 %v558, %v560
    %v679 = vadd.bf16 %v559, %v561
    %v680 = vadd.bf16 %v562, %v564
    %v681 = vadd.bf16 %v563, %v565
    %v682 = vadd.bf16 %v566, %v568
    %v683 = vadd.bf16 %v567, %v569
    %v684 = vadd.bf16 %v570, %v572
    %v685 = vadd.bf16 %v571, %v573
    %v686 = vadd.bf16 %v574, %v576
    %v687 = vadd.bf16 %v575, %v577
    %v688 = vadd.bf16 %v578, %v580
    %v689 = vadd.bf16 %v579, %v581
    %v690 = vadd.bf16 %v582, %v584
    %v691 = vadd.bf16 %v583, %v585
    %v692 = vadd.bf16 %v586, %v588
    %v693 = vadd.bf16 %v587, %v589
    %v694 = vadd.bf16 %v590, %v592
    %v695 = vadd.bf16 %v591, %v593
    %v696 = vadd.bf16 %v594, %v596
    %v697 = vadd.bf16 %v595, %v597
    %v698 = vadd.bf16 %v598, %v600
    %v699 = vadd.bf16 %v599, %v601
    %v700 = vadd.bf16 %v602, %v604
    %v701 = vadd.bf16 %v603, %v605
    %v702 = vadd.bf16 %v606, %v608
    %v703 = vadd.bf16 %v607, %v609
    %v704 = vadd.bf16 %v610, %v612
    %v705 = vadd.bf16 %v611, %v613
    %v706 = vadd.bf16 %v614, %v616
    %v707 = vadd.bf16 %v615, %v617
    %v708 = vadd.bf16 %v618, %v620
    %v709 = vadd.bf16 %v619, %v621
    %v710 = vadd.bf16 %v622, %v624
    %v711 = vadd.bf16 %v623, %v625
    %v712 = vadd.bf16 %v626, %v628
    %v713 = vadd.bf16 %v627, %v629
    %v714 = vadd.bf16 %v630, %v632
    %v715 = vadd.bf16 %v631, %v633
    %v716 = vadd.bf16 %v634, %v636
    %v717 = vadd.bf16 %v635, %v637
    %v718 = vadd.bf16 %v638, %v640
    %v719 = vadd.bf16 %v639, %v641
    %v720 = vadd.bf16 %v642, %v644
    %v721 = vadd.bf16 %v643, %v645
    %v722 = vadd.bf16 %v646, %v648
    %v723 = vadd.bf16 %v647, %v649
    %v724 = vadd.bf16 %v650, %v652
    %v725 = vadd.bf16 %v651, %v653
    %v726 = vadd.bf16 %v654, %v656
    %v727 = vadd.bf16 %v655, %v657
    %v728 = vadd.bf16 %v658, %v660
    %v729 = vadd.bf16 %v659, %v661
    %v730 = vadd.bf16 %v662, %v664
    %v731 = vadd.bf16 %v663, %v665
    %v732 = vadd.bf16 %v666, %v668
    %v733 = vadd.bf16 %v667, %v669
    %v798 = vrot.slane %v670, 4
    %v799 = vrot.slane %v671, 4
    %v800 = vrot.slane %v672, 4
    %v801 = vrot.slane %v673, 4
    %v802 = vrot.slane %v674, 4
    %v803 = vrot.slane %v675, 4
    %v804 = vrot.slane %v676, 4
    %v805 = vrot.slane %v677, 4
    %v806 = vrot.slane %v678, 4
    %v807 = vrot.slane %v679, 4
    %v808 = vrot.slane %v680, 4
    %v809 = vrot.slane %v681, 4
    %v810 = vrot.slane %v682, 4
    %v811 = vrot.slane %v683, 4
    %v812 = vrot.slane %v684, 4
    %v813 = vrot.slane %v685, 4
    %v814 = vrot.slane %v686, 4
    %v815 = vrot.slane %v687, 4
    %v816 = vrot.slane %v688, 4
    %v817 = vrot.slane %v689, 4
    %v818 = vrot.slane %v690, 4
    %v819 = vrot.slane %v691, 4
    %v820 = vrot.slane %v692, 4
    %v821 = vrot.slane %v693, 4
    %v822 = vrot.slane %v694, 4
    %v823 = vrot.slane %v695, 4
    %v824 = vrot.slane %v696, 4
    %v825 = vrot.slane %v697, 4
    %v826 = vrot.slane %v698, 4
    %v827 = vrot.slane %v699, 4
    %v828 = vrot.slane %v700, 4
    %v829 = vrot.slane %v701, 4
    %v830 = vrot.slane %v702, 4
    %v831 = vrot.slane %v703, 4
    %v832 = vrot.slane %v704, 4
    %v833 = vrot.slane %v705, 4
    %v834 = vrot.slane %v706, 4
    %v835 = vrot.slane %v707, 4
    %v836 = vrot.slane %v708, 4
    %v837 = vrot.slane %v709, 4
    %v838 = vrot.slane %v710, 4
    %v839 = vrot.slane %v711, 4
    %v840 = vrot.slane %v712, 4
    %v841 = vrot.slane %v713, 4
    %v842 = vrot.slane %v714, 4
    %v843 = vrot.slane %v715, 4
    %v844 = vrot.slane %v716, 4
    %v845 = vrot.slane %v717, 4
    %v846 = vrot.slane %v718, 4
    %v847 = vrot.slane %v719, 4
    %v848 = vrot.slane %v720, 4
    %v849 = vrot.slane %v721, 4
    %v850 = vrot.slane %v722, 4
    %v851 = vrot.slane %v723, 4
    %v852 = vrot.slane %v724, 4
    %v853 = vrot.slane %v725, 4
    %v854 = vrot.slane %v726, 4
    %v855 = vrot.slane %v727, 4
    %v856 = vrot.slane %v728, 4
    %v857 = vrot.slane %v729, 4
    %v858 = vrot.slane %v730, 4
    %v859 = vrot.slane %v731, 4
    %v860 = vrot.slane %v732, 4
    %v861 = vrot.slane %v733, 4
    %v926 = vadd.bf16 %v670, %v798
    %v927 = vadd.bf16 %v671, %v799
    %v928 = vadd.bf16 %v672, %v800
    %v929 = vadd.bf16 %v673, %v801
    %v930 = vadd.bf16 %v674, %v802
    %v931 = vadd.bf16 %v675, %v803
    %v932 = vadd.bf16 %v676, %v804
    %v933 = vadd.bf16 %v677, %v805
    %v934 = vadd.bf16 %v678, %v806
    %v935 = vadd.bf16 %v679, %v807
    %v936 = vadd.bf16 %v680, %v808
    %v937 = vadd.bf16 %v681, %v809
    %v938 = vadd.bf16 %v682, %v810
    %v939 = vadd.bf16 %v683, %v811
    %v940 = vadd.bf16 %v684, %v812
    %v941 = vadd.bf16 %v685, %v813
    %v942 = vadd.bf16 %v686, %v814
    %v943 = vadd.bf16 %v687, %v815
    %v944 = vadd.bf16 %v688, %v816
    %v945 = vadd.bf16 %v689, %v817
    %v946 = vadd.bf16 %v690, %v818
    %v947 = vadd.bf16 %v691, %v819
    %v948 = vadd.bf16 %v692, %v820
    %v949 = vadd.bf16 %v693, %v821
    %v950 = vadd.bf16 %v694, %v822
    %v951 = vadd.bf16 %v695, %v823
    %v952 = vadd.bf16 %v696, %v824
    %v953 = vadd.bf16 %v697, %v825
    %v954 = vadd.bf16 %v698, %v826
    %v955 = vadd.bf16 %v699, %v827
    %v956 = vadd.bf16 %v700, %v828
    %v957 = vadd.bf16 %v701, %v829
    %v958 = vadd.bf16 %v702, %v830
    %v959 = vadd.bf16 %v703, %v831
    %v960 = vadd.bf16 %v704, %v832
    %v961 = vadd.bf16 %v705, %v833
    %v962 = vadd.bf16 %v706, %v834
    %v963 = vadd.bf16 %v707, %v835
    %v964 = vadd.bf16 %v708, %v836
    %v965 = vadd.bf16 %v709, %v837
    %v966 = vadd.bf16 %v710, %v838
    %v967 = vadd.bf16 %v711, %v839
    %v968 = vadd.bf16 %v712, %v840
    %v969 = vadd.bf16 %v713, %v841
    %v970 = vadd.bf16 %v714, %v842
    %v971 = vadd.bf16 %v715, %v843
    %v972 = vadd.bf16 %v716, %v844
    %v973 = vadd.bf16 %v717, %v845
    %v974 = vadd.bf16 %v718, %v846
    %v975 = vadd.bf16 %v719, %v847
    %v976 = vadd.bf16 %v720, %v848
    %v977 = vadd.bf16 %v721, %v849
    %v978 = vadd.bf16 %v722, %v850
    %v979 = vadd.bf16 %v723, %v851
    %v980 = vadd.bf16 %v724, %v852
    %v981 = vadd.bf16 %v725, %v853
    %v982 = vadd.bf16 %v726, %v854
    %v983 = vadd.bf16 %v727, %v855
    %v984 = vadd.bf16 %v728, %v856
    %v985 = vadd.bf16 %v729, %v857
    %v986 = vadd.bf16 %v730, %v858
    %v987 = vadd.bf16 %v731, %v859
    %v988 = vadd.bf16 %v732, %v860
    %v989 = vadd.bf16 %v733, %v861
    %v990 = vld [vmem:[#allocation8] sm:$0xf]
    %v991 = vld [vmem:[#allocation8 + $0x4] sm:$0xf]
    %v992 = vld [vmem:[#allocation8 + $0x8] sm:$0xf]
    %v993 = vld [vmem:[#allocation8 + $0xc] sm:$0xf]
    %v994 = vld [vmem:[#allocation8 + $0x10] sm:$0xf]
    %v995 = vld [vmem:[#allocation8 + $0x14] sm:$0xf]
    %v996 = vld [vmem:[#allocation8 + $0x18] sm:$0xf]
    %v997 = vld [vmem:[#allocation8 + $0x1c] sm:$0xf]
    %v998 = vld [vmem:[#allocation8 + $0x20] sm:$0xf]
    %v999 = vld [vmem:[#allocation8 + $0x24] sm:$0xf]
    %v1000 = vld [vmem:[#allocation8 + $0x28] sm:$0xf]
    %v1001 = vld [vmem:[#allocation8 + $0x2c] sm:$0xf]
    %v1002 = vld [vmem:[#allocation8 + $0x30] sm:$0xf]
    %v1003 = vld [vmem:[#allocation8 + $0x34] sm:$0xf]
    %v1004 = vld [vmem:[#allocation8 + $0x38] sm:$0xf]
    %v1005 = vld [vmem:[#allocation8 + $0x3c] sm:$0xf]
    %v1070 = vunpack.c.l.b16 %v926
    %v1071 = vunpack.c.l.b16 %v927
    %v1072 = vunpack.c.l.b16 %v928
    %v1073 = vunpack.c.l.b16 %v929
    %v1074 = vunpack.c.l.b16 %v930
    %v1075 = vunpack.c.l.b16 %v931
    %v1076 = vunpack.c.l.b16 %v932
    %v1077 = vunpack.c.l.b16 %v933
    %v1078 = vunpack.c.l.b16 %v934
    %v1079 = vunpack.c.l.b16 %v935
    %v1080 = vunpack.c.l.b16 %v936
    %v1081 = vunpack.c.l.b16 %v937
    %v1082 = vunpack.c.l.b16 %v938
    %v1083 = vunpack.c.l.b16 %v939
    %v1084 = vunpack.c.l.b16 %v940
    %v1085 = vunpack.c.l.b16 %v941
    %v1086 = vunpack.c.l.b16 %v942
    %v1087 = vunpack.c.l.b16 %v943
    %v1088 = vunpack.c.l.b16 %v944
    %v1089 = vunpack.c.l.b16 %v945
    %v1090 = vunpack.c.l.b16 %v946
    %v1091 = vunpack.c.l.b16 %v947
    %v1092 = vunpack.c.l.b16 %v948
    %v1093 = vunpack.c.l.b16 %v949
    %v1094 = vunpack.c.l.b16 %v950
    %v1095 = vunpack.c.l.b16 %v951
    %v1096 = vunpack.c.l.b16 %v952
    %v1097 = vunpack.c.l.b16 %v953
    %v1098 = vunpack.c.l.b16 %v954
    %v1099 = vunpack.c.l.b16 %v955
    %v1100 = vunpack.c.l.b16 %v956
    %v1101 = vunpack.c.l.b16 %v957
    %v1102 = vunpack.c.l.b16 %v958
    %v1103 = vunpack.c.l.b16 %v959
    %v1104 = vunpack.c.l.b16 %v960
    %v1105 = vunpack.c.l.b16 %v961
    %v1106 = vunpack.c.l.b16 %v962
    %v1107 = vunpack.c.l.b16 %v963
    %v1108 = vunpack.c.l.b16 %v964
    %v1109 = vunpack.c.l.b16 %v965
    %v1110 = vunpack.c.l.b16 %v966
    %v1111 = vunpack.c.l.b16 %v967
    %v1112 = vunpack.c.l.b16 %v968
    %v1113 = vunpack.c.l.b16 %v969
    %v1114 = vunpack.c.l.b16 %v970
    %v1115 = vunpack.c.l.b16 %v971
    %v1116 = vunpack.c.l.b16 %v972
    %v1117 = vunpack.c.l.b16 %v973
    %v1118 = vunpack.c.l.b16 %v974
    %v1119 = vunpack.c.l.b16 %v975
    %v1120 = vunpack.c.l.b16 %v976
    %v1121 = vunpack.c.l.b16 %v977
    %v1122 = vunpack.c.l.b16 %v978
    %v1123 = vunpack.c.l.b16 %v979
    %v1124 = vunpack.c.l.b16 %v980
    %v1125 = vunpack.c.l.b16 %v981
    %v1126 = vunpack.c.l.b16 %v982
    %v1127 = vunpack.c.l.b16 %v983
    %v1128 = vunpack.c.l.b16 %v984
    %v1129 = vunpack.c.l.b16 %v985
    %v1130 = vunpack.c.l.b16 %v986
    %v1131 = vunpack.c.l.b16 %v987
    %v1132 = vunpack.c.l.b16 %v988
    %v1133 = vunpack.c.l.b16 %v989
    %v1134 = vpack.c.b16 %v1071, %v1070
    %v1135 = vpack.c.b16 %v1073, %v1072
    %v1136 = vpack.c.b16 %v1075, %v1074
    %v1137 = vpack.c.b16 %v1077, %v1076
    %v1138 = vpack.c.b16 %v1079, %v1078
    %v1139 = vpack.c.b16 %v1081, %v1080
    %v1140 = vpack.c.b16 %v1083, %v1082
    %v1141 = vpack.c.b16 %v1085, %v1084
    %v1142 = vpack.c.b16 %v1087, %v1086
    %v1143 = vpack.c.b16 %v1089, %v1088
    %v1144 = vpack.c.b16 %v1091, %v1090
    %v1145 = vpack.c.b16 %v1093, %v1092
    %v1146 = vpack.c.b16 %v1095, %v1094
    %v1147 = vpack.c.b16 %v1097, %v1096
    %v1148 = vpack.c.b16 %v1099, %v1098
    %v1149 = vpack.c.b16 %v1101, %v1100
    %v1150 = vpack.c.b16 %v1103, %v1102
    %v1151 = vpack.c.b16 %v1105, %v1104
    %v1152 = vpack.c.b16 %v1107, %v1106
    %v1153 = vpack.c.b16 %v1109, %v1108
    %v1154 = vpack.c.b16 %v1111, %v1110
    %v1155 = vpack.c.b16 %v1113, %v1112
    %v1156 = vpack.c.b16 %v1115, %v1114
    %v1157 = vpack.c.b16 %v1117, %v1116
    %v1158 = vpack.c.b16 %v1119, %v1118
    %v1159 = vpack.c.b16 %v1121, %v1120
    %v1160 = vpack.c.b16 %v1123, %v1122
    %v1161 = vpack.c.b16 %v1125, %v1124
    %v1162 = vpack.c.b16 %v1127, %v1126
    %v1163 = vpack.c.b16 %v1129, %v1128
    %v1164 = vpack.c.b16 %v1131, %v1130
    %v1165 = vpack.c.b16 %v1133, %v1132
    %v1214 = vunpack.c.l.b16 %v990
    %v1215 = vunpack.c.l.b16 %v991
    %v1216 = vunpack.c.l.b16 %v992
    %v1217 = vunpack.c.l.b16 %v993
    %v1218 = vunpack.c.l.b16 %v994
    %v1219 = vunpack.c.l.b16 %v995
    %v1220 = vunpack.c.l.b16 %v996
    %v1221 = vunpack.c.l.b16 %v997
    %v1222 = vunpack.c.l.b16 %v998
    %v1223 = vunpack.c.l.b16 %v999
    %v1224 = vunpack.c.l.b16 %v1000
    %v1225 = vunpack.c.l.b16 %v1001
    %v1226 = vunpack.c.l.b16 %v1002
    %v1227 = vunpack.c.l.b16 %v1003
    %v1228 = vunpack.c.l.b16 %v1004
    %v1229 = vunpack.c.l.b16 %v1005
    %v1230 = vpack.c.b16 %v1215, %v1214
    %v1231 = vpack.c.b16 %v1217, %v1216
    %v1232 = vpack.c.b16 %v1219, %v1218
    %v1233 = vpack.c.b16 %v1221, %v1220
    %v1234 = vpack.c.b16 %v1223, %v1222
    %v1235 = vpack.c.b16 %v1225, %v1224
    %v1236 = vpack.c.b16 %v1227, %v1226
    %v1237 = vpack.c.b16 %v1229, %v1228
    %1246 = vmatprep.subr.bf16.mxu0 0
    %1247 = vmatpush1.bf16.msra.mxu0 %v1230
    %1248 = vmatprep.subr.bf16.mxu0 0
    %1249 = vmatpush1.bf16.msra.mxu0 %v1231
    %1250 = vmatprep.subr.bf16.mxu0 0
    %1251 = vmatpush1.bf16.msra.mxu0 %v1232
    %1252 = vmatprep.subr.bf16.mxu0 0
    %1253 = vmatpush1.bf16.msra.mxu0 %v1233
    %1254 = vmatprep.subr.bf16.mxu0 0
    %1255 = vmatpush1.bf16.msra.mxu0 %v1234
    %1256 = vmatprep.subr.bf16.mxu0 0
    %1257 = vmatpush1.bf16.msra.mxu0 %v1235
    %1258 = vmatprep.subr.bf16.mxu0 0
    %1259 = vmatpush1.bf16.msra.mxu0 %v1236
    %1260 = vmatprep.subr.bf16.mxu0 0
    %1261 = vmatpush1.bf16.msra.mxu0 %v1237
    %1262 = vmatprep.subr.bf16.mxu0 0
    %1263 = vmatpush1.bf16.msra.mxu0 0
    %1264 = vmatprep.subr.bf16.mxu0 0
    %1265 = vmatpush1.bf16.msra.mxu0 0
    %1266 = vmatprep.subr.bf16.mxu0 0
    %1267 = vmatpush1.bf16.msra.mxu0 0
    %1268 = vmatprep.subr.bf16.mxu0 0
    %1269 = vmatpush1.bf16.msra.mxu0 0
    %1270 = vmatprep.subr.bf16.mxu0 0
    %1271 = vmatpush1.bf16.msra.mxu0 0
    %1272 = vmatprep.subr.bf16.mxu0 0
    %1273 = vmatpush1.bf16.msra.mxu0 0
    %1274 = vmatprep.subr.bf16.mxu0 0
    %1275 = vmatpush1.bf16.msra.mxu0 0
    %1276 = vmatprep.subr.bf16.mxu0 0
    %1277 = vmatpush1.bf16.msra.mxu0 0
    %1278 = vmatprep.mubr.bf16.mxu0 0
    %1279 = vmatmul.mubr.bf16.gmra.mrb[0].mxu0 %v1134
    %v1280 = vpop.f32.mrb[0].mxu0
    %v1281 = vadd.f32 0.0, %v1280
    %v1282 = vpop.f32.mrb[0].mxu0
    %v1283 = vpop.f32.mrb[0].mxu0
    %v1284 = vadd.f32 0.0, %v1283
    %v1285 = vpop.f32.mrb[0].mxu0
    %1286 = vmatprep.mubr.bf16.mxu0 0
    %1287 = vmatmul.mubr.bf16.gmra.mrb[0].mxu0 %v1135
    %v1288 = vpop.f32.mrb[0].mxu0
    %v1289 = vadd.f32 0.0, %v1288
    %v1290 = vpop.f32.mrb[0].mxu0
    %v1291 = vpop.f32.mrb[0].mxu0
    %v1292 = vadd.f32 0.0, %v1291
    %v1293 = vpop.f32.mrb[0].mxu0
    %1294 = vmatprep.mubr.bf16.mxu0 0
    %1295 = vmatmul.mubr.bf16.gmra.mrb[0].mxu0 %v1136
    %v1296 = vpop.f32.mrb[0].mxu0
    %v1297 = vadd.f32 0.0, %v1296
    %v1298 = vpop.f32.mrb[0].mxu0
    %v1299 = vpop.f32.mrb[0].mxu0
    %v1300 = vadd.f32 0.0, %v1299
    %v1301 = vpop.f32.mrb[0].mxu0
    %1302 = vmatprep.mubr.bf16.mxu0 0
    %1303 = vmatmul.mubr.bf16.gmra.mrb[0].mxu0 %v1137
    %v1304 = vpop.f32.mrb[0].mxu0
    %v1305 = vadd.f32 0.0, %v1304
    %v1306 = vpop.f32.mrb[0].mxu0
    %v1307 = vpop.f32.mrb[0].mxu0
    %v1308 = vadd.f32 0.0, %v1307
    %v1309 = vpop.f32.mrb[0].mxu0
    %1310 = vmatprep.mubr.bf16.mxu0 0
    %1311 = vmatmul.mubr.bf16.gmra.mrb[0].mxu0 %v1138
    %v1312 = vpop.f32.mrb[0].mxu0
    %v1313 = vadd.f32 0.0, %v1312
    %v1314 = vpop.f32.mrb[0].mxu0
    %v1315 = vpop.f32.mrb[0].mxu0
    %v1316 = vadd.f32 0.0, %v1315
    %v1317 = vpop.f32.mrb[0].mxu0
    %1318 = vmatprep.mubr.bf16.mxu0 0
    %1319 = vmatmul.mubr.bf16.gmra.mrb[0].mxu0 %v1139
    %v1320 = vpop.f32.mrb[0].mxu0
    %v1321 = vadd.f32 0.0, %v1320
    %v1322 = vpop.f32.mrb[0].mxu0
    %v1323 = vpop.f32.mrb[0].mxu0
    %v1324 = vadd.f32 0.0, %v1323
    %v1325 = vpop.f32.mrb[0].mxu0
    %1326 = vmatprep.mubr.bf16.mxu0 0
    %1327 = vmatmul.mubr.bf16.gmra.mrb[0].mxu0 %v1140
    %v1328 = vpop.f32.mrb[0].mxu0
    %v1329 = vadd.f32 0.0, %v1328
    %v1330 = vpop.f32.mrb[0].mxu0
    %v1331 = vpop.f32.mrb[0].mxu0
    %v1332 = vadd.f32 0.0, %v1331
    %v1333 = vpop.f32.mrb[0].mxu0
    %1334 = vmatprep.mubr.bf16.mxu0 0
    %1335 = vmatmul.mubr.bf16.gmra.mrb[0].mxu0 %v1141
    %v1336 = vpop.f32.mrb[0].mxu0
    %v1337 = vadd.f32 0.0, %v1336
    %v1338 = vpop.f32.mrb[0].mxu0
    %v1339 = vpop.f32.mrb[0].mxu0
    %v1340 = vadd.f32 0.0, %v1339
    %v1341 = vpop.f32.mrb[0].mxu0
    %1342 = vmatprep.mubr.bf16.mxu0 0
    %1343 = vmatmul.mubr.bf16.gmra.mrb[0].mxu0 %v1142
    %v1344 = vpop.f32.mrb[0].mxu0
    %v1345 = vadd.f32 0.0, %v1344
    %v1346 = vpop.f32.mrb[0].mxu0
    %v1347 = vpop.f32.mrb[0].mxu0
    %v1348 = vadd.f32 0.0, %v1347
    %v1349 = vpop.f32.mrb[0].mxu0
    %1350 = vmatprep.mubr.bf16.mxu0 0
    %1351 = vmatmul.mubr.bf16.gmra.mrb[0].mxu0 %v1143
    %v1352 = vpop.f32.mrb[0].mxu0
    %v1353 = vadd.f32 0.0, %v1352
    %v1354 = vpop.f32.mrb[0].mxu0
    %v1355 = vpop.f32.mrb[0].mxu0
    %v1356 = vadd.f32 0.0, %v1355
    %v1357 = vpop.f32.mrb[0].mxu0
    %1358 = vmatprep.mubr.bf16.mxu0 0
    %1359 = vmatmul.mubr.bf16.gmra.mrb[0].mxu0 %v1144
    %v1360 = vpop.f32.mrb[0].mxu0
    %v1361 = vadd.f32 0.0, %v1360
    %v1362 = vpop.f32.mrb[0].mxu0
    %v1363 = vpop.f32.mrb[0].mxu0
    %v1364 = vadd.f32 0.0, %v1363
    %v1365 = vpop.f32.mrb[0].mxu0
    %1366 = vmatprep.mubr.bf16.mxu0 0
    %1367 = vmatmul.mubr.bf16.gmra.mrb[0].mxu0 %v1145
    %v1368 = vpop.f32.mrb[0].mxu0
    %v1369 = vadd.f32 0.0, %v1368
    %v1370 = vpop.f32.mrb[0].mxu0
    %v1371 = vpop.f32.mrb[0].mxu0
    %v1372 = vadd.f32 0.0, %v1371
    %v1373 = vpop.f32.mrb[0].mxu0
    %1374 = vmatprep.mubr.bf16.mxu0 0
    %1375 = vmatmul.mubr.bf16.gmra.mrb[0].mxu0 %v1146
    %v1376 = vpop.f32.mrb[0].mxu0
    %v1377 = vadd.f32 0.0, %v1376
    %v1378 = vpop.f32.mrb[0].mxu0
    %v1379 = vpop.f32.mrb[0].mxu0
    %v1380 = vadd.f32 0.0, %v1379
    %v1381 = vpop.f32.mrb[0].mxu0
    %1382 = vmatprep.mubr.bf16.mxu0 0
    %1383 = vmatmul.mubr.bf16.gmra.mrb[0].mxu0 %v1147
    %v1384 = vpop.f32.mrb[0].mxu0
    %v1385 = vadd.f32 0.0, %v1384
    %v1386 = vpop.f32.mrb[0].mxu0
    %v1387 = vpop.f32.mrb[0].mxu0
    %v1388 = vadd.f32 0.0, %v1387
    %v1389 = vpop.f32.mrb[0].mxu0
    %1390 = vmatprep.mubr.bf16.mxu0 0
    %1391 = vmatmul.mubr.bf16.gmra.mrb[0].mxu0 %v1148
    %v1392 = vpop.f32.mrb[0].mxu0
    %v1393 = vadd.f32 0.0, %v1392
    %v1394 = vpop.f32.mrb[0].mxu0
    %v1395 = vpop.f32.mrb[0].mxu0
    %v1396 = vadd.f32 0.0, %v1395
    %v1397 = vpop.f32.mrb[0].mxu0
    %1398 = vmatprep.mubr.bf16.mxu0 0
    %1399 = vmatmul.mubr.bf16.gmra.mrb[0].mxu0 %v1149
    %v1400 = vpop.f32.mrb[0].mxu0
    %v1401 = vadd.f32 0.0, %v1400
    %v1402 = vpop.f32.mrb[0].mxu0
    %v1403 = vpop.f32.mrb[0].mxu0
    %v1404 = vadd.f32 0.0, %v1403
    %v1405 = vpop.f32.mrb[0].mxu0
    %1406 = vmatprep.mubr.bf16.mxu0 0
    %1407 = vmatmul.mubr.bf16.gmra.mrb[0].mxu0 %v1150
    %v1408 = vpop.f32.mrb[0].mxu0
    %v1409 = vadd.f32 0.0, %v1408
    %v1410 = vpop.f32.mrb[0].mxu0
    %v1411 = vpop.f32.mrb[0].mxu0
    %v1412 = vadd.f32 0.0, %v1411
    %v1413 = vpop.f32.mrb[0].mxu0
    %1414 = vmatprep.mubr.bf16.mxu0 0
    %1415 = vmatmul.mubr.bf16.gmra.mrb[0].mxu0 %v1151
    %v1416 = vpop.f32.mrb[0].mxu0
    %v1417 = vadd.f32 0.0, %v1416
    %v1418 = vpop.f32.mrb[0].mxu0
    %v1419 = vpop.f32.mrb[0].mxu0
    %v1420 = vadd.f32 0.0, %v1419
    %v1421 = vpop.f32.mrb[0].mxu0
    %1422 = vmatprep.mubr.bf16.mxu0 0
    %1423 = vmatmul.mubr.bf16.gmra.mrb[0].mxu0 %v1152
    %v1424 = vpop.f32.mrb[0].mxu0
    %v1425 = vadd.f32 0.0, %v1424
    %v1426 = vpop.f32.mrb[0].mxu0
    %v1427 = vpop.f32.mrb[0].mxu0
    %v1428 = vadd.f32 0.0, %v1427
    %v1429 = vpop.f32.mrb[0].mxu0
    %1430 = vmatprep.mubr.bf16.mxu0 0
    %1431 = vmatmul.mubr.bf16.gmra.mrb[0].mxu0 %v1153
    %v1432 = vpop.f32.mrb[0].mxu0
    %v1433 = vadd.f32 0.0, %v1432
    %v1434 = vpop.f32.mrb[0].mxu0
    %v1435 = vpop.f32.mrb[0].mxu0
    %v1436 = vadd.f32 0.0, %v1435
    %v1437 = vpop.f32.mrb[0].mxu0
    %1438 = vmatprep.mubr.bf16.mxu0 0
    %1439 = vmatmul.mubr.bf16.gmra.mrb[0].mxu0 %v1154
    %v1440 = vpop.f32.mrb[0].mxu0
    %v1441 = vadd.f32 0.0, %v1440
    %v1442 = vpop.f32.mrb[0].mxu0
    %v1443 = vpop.f32.mrb[0].mxu0
    %v1444 = vadd.f32 0.0, %v1443
    %v1445 = vpop.f32.mrb[0].mxu0
    %1446 = vmatprep.mubr.bf16.mxu0 0
    %1447 = vmatmul.mubr.bf16.gmra.mrb[0].mxu0 %v1155
    %v1448 = vpop.f32.mrb[0].mxu0
    %v1449 = vadd.f32 0.0, %v1448
    %v1450 = vpop.f32.mrb[0].mxu0
    %v1451 = vpop.f32.mrb[0].mxu0
    %v1452 = vadd.f32 0.0, %v1451
    %v1453 = vpop.f32.mrb[0].mxu0
    %1454 = vmatprep.mubr.bf16.mxu0 0
    %1455 = vmatmul.mubr.bf16.gmra.mrb[0].mxu0 %v1156
    %v1456 = vpop.f32.mrb[0].mxu0
    %v1457 = vadd.f32 0.0, %v1456
    %v1458 = vpop.f32.mrb[0].mxu0
    %v1459 = vpop.f32.mrb[0].mxu0
    %v1460 = vadd.f32 0.0, %v1459
    %v1461 = vpop.f32.mrb[0].mxu0
    %1462 = vmatprep.mubr.bf16.mxu0 0
    %1463 = vmatmul.mubr.bf16.gmra.mrb[0].mxu0 %v1157
    %v1464 = vpop.f32.mrb[0].mxu0
    %v1465 = vadd.f32 0.0, %v1464
    %v1466 = vpop.f32.mrb[0].mxu0
    %v1467 = vpop.f32.mrb[0].mxu0
    %v1468 = vadd.f32 0.0, %v1467
    %v1469 = vpop.f32.mrb[0].mxu0
    %1470 = vmatprep.mubr.bf16.mxu0 0
    %1471 = vmatmul.mubr.bf16.gmra.mrb[0].mxu0 %v1158
    %v1472 = vpop.f32.mrb[0].mxu0
    %v1473 = vadd.f32 0.0, %v1472
    %v1474 = vpop.f32.mrb[0].mxu0
    %v1475 = vpop.f32.mrb[0].mxu0
    %v1476 = vadd.f32 0.0, %v1475
    %v1477 = vpop.f32.mrb[0].mxu0
    %1478 = vmatprep.mubr.bf16.mxu0 0
    %1479 = vmatmul.mubr.bf16.gmra.mrb[0].mxu0 %v1159
    %v1480 = vpop.f32.mrb[0].mxu0
    %v1481 = vadd.f32 0.0, %v1480
    %v1482 = vpop.f32.mrb[0].mxu0
    %v1483 = vpop.f32.mrb[0].mxu0
    %v1484 = vadd.f32 0.0, %v1483
    %v1485 = vpop.f32.mrb[0].mxu0
    %1486 = vmatprep.mubr.bf16.mxu0 0
    %1487 = vmatmul.mubr.bf16.gmra.mrb[0].mxu0 %v1160
    %v1488 = vpop.f32.mrb[0].mxu0
    %v1489 = vadd.f32 0.0, %v1488
    %v1490 = vpop.f32.mrb[0].mxu0
    %v1491 = vpop.f32.mrb[0].mxu0
    %v1492 = vadd.f32 0.0, %v1491
    %v1493 = vpop.f32.mrb[0].mxu0
    %1494 = vmatprep.mubr.bf16.mxu0 0
    %1495 = vmatmul.mubr.bf16.gmra.mrb[0].mxu0 %v1161
    %v1496 = vpop.f32.mrb[0].mxu0
    %v1497 = vadd.f32 0.0, %v1496
    %v1498 = vpop.f32.mrb[0].mxu0
    %v1499 = vpop.f32.mrb[0].mxu0
    %v1500 = vadd.f32 0.0, %v1499
    %v1501 = vpop.f32.mrb[0].mxu0
    %1502 = vmatprep.mubr.bf16.mxu0 0
    %1503 = vmatmul.mubr.bf16.gmra.mrb[0].mxu0 %v1162
    %v1504 = vpop.f32.mrb[0].mxu0
    %v1505 = vadd.f32 0.0, %v1504
    %v1506 = vpop.f32.mrb[0].mxu0
    %v1507 = vpop.f32.mrb[0].mxu0
    %v1508 = vadd.f32 0.0, %v1507
    %v1509 = vpop.f32.mrb[0].mxu0
    %1510 = vmatprep.mubr.bf16.mxu0 0
    %1511 = vmatmul.mubr.bf16.gmra.mrb[0].mxu0 %v1163
    %v1512 = vpop.f32.mrb[0].mxu0
    %v1513 = vadd.f32 0.0, %v1512
    %v1514 = vpop.f32.mrb[0].mxu0
    %v1515 = vpop.f32.mrb[0].mxu0
    %v1516 = vadd.f32 0.0, %v1515
    %v1517 = vpop.f32.mrb[0].mxu0
    %1518 = vmatprep.mubr.bf16.mxu0 0
    %1519 = vmatmul.mubr.bf16.gmra.mrb[0].mxu0 %v1164
    %v1520 = vpop.f32.mrb[0].mxu0
    %v1521 = vadd.f32 0.0, %v1520
    %v1522 = vpop.f32.mrb[0].mxu0
    %v1523 = vpop.f32.mrb[0].mxu0
    %v1524 = vadd.f32 0.0, %v1523
    %v1525 = vpop.f32.mrb[0].mxu0
    %1526 = vmatprep.mubr.bf16.mxu0 0
    %1527 = vmatmul.mubr.bf16.gmra.mrb[0].mxu0 %v1165
    %v1528 = vpop.f32.mrb[0].mxu0
    %v1529 = vadd.f32 0.0, %v1528
    %v1530 = vpop.f32.mrb[0].mxu0
    %v1531 = vpop.f32.mrb[0].mxu0
    %v1532 = vadd.f32 0.0, %v1531
    %v1533 = vpop.f32.mrb[0].mxu0
    %1534 = vdwg.mxu0
    %1535 = vst [vmem:[#allocation10] sm:$0xff] %v1281
    %1536 = vst [vmem:[#allocation10 + $0x8] sm:$0xff] %v1284
    %1537 = vst [vmem:[#allocation10 + $0x10] sm:$0xff] %v1289
    %1538 = vst [vmem:[#allocation10 + $0x18] sm:$0xff] %v1292
    %1539 = vst [vmem:[#allocation10 + $0x20] sm:$0xff] %v1297
    %1540 = vst [vmem:[#allocation10 + $0x28] sm:$0xff] %v1300
    %1541 = vst [vmem:[#allocation10 + $0x30] sm:$0xff] %v1305
    %1542 = vst [vmem:[#allocation10 + $0x38] sm:$0xff] %v1308
    %1543 = vst [vmem:[#allocation10 + $0x40] sm:$0xff] %v1313
    %1544 = vst [vmem:[#allocation10 + $0x48] sm:$0xff] %v1316
    %1545 = vst [vmem:[#allocation10 + $0x50] sm:$0xff] %v1321
    %1546 = vst [vmem:[#allocation10 + $0x58] sm:$0xff] %v1324
    %1547 = vst [vmem:[#allocation10 + $0x60] sm:$0xff] %v1329
    %1548 = vst [vmem:[#allocation10 + $0x68] sm:$0xff] %v1332
    %1549 = vst [vmem:[#allocation10 + $0x70] sm:$0xff] %v1337
    %1550 = vst [vmem:[#allocation10 + $0x78] sm:$0xff] %v1340
    %1551 = vst [vmem:[#allocation10 + $0x80] sm:$0xff] %v1345
    %1552 = vst [vmem:[#allocation10 + $0x88] sm:$0xff] %v1348
    %1553 = vst [vmem:[#allocation10 + $0x90] sm:$0xff] %v1353
    %1554 = vst [vmem:[#allocation10 + $0x98] sm:$0xff] %v1356
    %1555 = vst [vmem:[#allocation10 + $0xa0] sm:$0xff] %v1361
    %1556 = vst [vmem:[#allocation10 + $0xa8] sm:$0xff] %v1364
    %1557 = vst [vmem:[#allocation10 + $0xb0] sm:$0xff] %v1369
    %1558 = vst [vmem:[#allocation10 + $0xb8] sm:$0xff] %v1372
    %1559 = vst [vmem:[#allocation10 + $0xc0] sm:$0xff] %v1377
    %1560 = vst [vmem:[#allocation10 + $0xc8] sm:$0xff] %v1380
    %1561 = vst [vmem:[#allocation10 + $0xd0] sm:$0xff] %v1385
    %1562 = vst [vmem:[#allocation10 + $0xd8] sm:$0xff] %v1388
    %1563 = vst [vmem:[#allocation10 + $0xe0] sm:$0xff] %v1393
    %1564 = vst [vmem:[#allocation10 + $0xe8] sm:$0xff] %v1396
    %1565 = vst [vmem:[#allocation10 + $0xf0] sm:$0xff] %v1401
    %1566 = vst [vmem:[#allocation10 + $0xf8] sm:$0xff] %v1404
    %1567 = vst [vmem:[#allocation10 + $0x100] sm:$0xff] %v1409
    %1568 = vst [vmem:[#allocation10 + $0x108] sm:$0xff] %v1412
    %1569 = vst [vmem:[#allocation10 + $0x110] sm:$0xff] %v1417
    %1570 = vst [vmem:[#allocation10 + $0x118] sm:$0xff] %v1420
    %1571 = vst [vmem:[#allocation10 + $0x120] sm:$0xff] %v1425
    %1572 = vst [vmem:[#allocation10 + $0x128] sm:$0xff] %v1428
    %1573 = vst [vmem:[#allocation10 + $0x130] sm:$0xff] %v1433
    %1574 = vst [vmem:[#allocation10 + $0x138] sm:$0xff] %v1436
    %1575 = vst [vmem:[#allocation10 + $0x140] sm:$0xff] %v1441
    %1576 = vst [vmem:[#allocation10 + $0x148] sm:$0xff] %v1444
    %1577 = vst [vmem:[#allocation10 + $0x150] sm:$0xff] %v1449
    %1578 = vst [vmem:[#allocation10 + $0x158] sm:$0xff] %v1452
    %1579 = vst [vmem:[#allocation10 + $0x160] sm:$0xff] %v1457
    %1580 = vst [vmem:[#allocation10 + $0x168] sm:$0xff] %v1460
    %1581 = vst [vmem:[#allocation10 + $0x170] sm:$0xff] %v1465
    %1582 = vst [vmem:[#allocation10 + $0x178] sm:$0xff] %v1468
    %1583 = vst [vmem:[#allocation10 + $0x180] sm:$0xff] %v1473
    %1584 = vst [vmem:[#allocation10 + $0x188] sm:$0xff] %v1476
    %1585 = vst [vmem:[#allocation10 + $0x190] sm:$0xff] %v1481
    %1586 = vst [vmem:[#allocation10 + $0x198] sm:$0xff] %v1484
    %1587 = vst [vmem:[#allocation10 + $0x1a0] sm:$0xff] %v1489
    %1588 = vst [vmem:[#allocation10 + $0x1a8] sm:$0xff] %v1492
    %1589 = vst [vmem:[#allocation10 + $0x1b0] sm:$0xff] %v1497
    %1590 = vst [vmem:[#allocation10 + $0x1b8] sm:$0xff] %v1500
    %1591 = vst [vmem:[#allocation10 + $0x1c0] sm:$0xff] %v1505
    %1592 = vst [vmem:[#allocation10 + $0x1c8] sm:$0xff] %v1508
    %1593 = vst [vmem:[#allocation10 + $0x1d0] sm:$0xff] %v1513
    %1594 = vst [vmem:[#allocation10 + $0x1d8] sm:$0xff] %v1516
    %1595 = vst [vmem:[#allocation10 + $0x1e0] sm:$0xff] %v1521
    %1596 = vst [vmem:[#allocation10 + $0x1e8] sm:$0xff] %v1524
    %1597 = vst [vmem:[#allocation10 + $0x1f0] sm:$0xff] %v1529
    %1598 = vst [vmem:[#allocation10 + $0x1f8] sm:$0xff] %v1532
    // Predicated region
    $region34: #{transition_forward.1} parent=1 // pred_check
      _
    $region35: #{transition_forward.1} parent=1 // pred_check_branch
      %1600 = sbr.rel (0) target = $region37
    $region36: #{transition_forward.1} parent=1 // pred_region
      %s1602 = ssub.s32 8192, 8192
      %1603 = vsyncadd [#allocation4], %s1602
      %s1604 = sshll.u32 [#allocation10], 4
      %s1605 = int_to_ptr.vmem [resolvable:$true] %s1604
      %1610 = dma.vmem_to_hbm [thread:$0]  %s1605, 8192, %s4, [#allocation4], 128, 128, 8
    $region37: #{transition_forward.1} parent=1 // pred_fallthru
      _
    // Predicated region
    $region38: #{transition_forward.1} parent=1 // pred_check
      _
    $region39: #{transition_forward.1} parent=1 // pred_check_branch
      %1612 = sbr.rel (0) target = $region41
    $region40: #{transition_forward.1} parent=1 // pred_region
      %1613 = dma.done [#allocation4], 8192
    $region41: #{transition_forward.1} parent=1 // pred_fallthru
      _
    %1614 = vsyncpa [#allocation3], 1
    %1615 = vsyncpa [#allocation6], 1
    %1616 = vsyncpa [#allocation9], 1
    %1617 = vsyncpa [#allocation4], 1

</llo_original>
